<compile_context>
chip_gen: v7x
topology: tpu7x:2x2x1
jax: 0.10.0
libtpu: 0.0.40
codegen_flags: <defaults>
</compile_context>

<pallas_src>
import functools

import jax
import jax.numpy as jnp
import numpy as np
from jax.experimental import pallas as pl
from jax.experimental.pallas import tpu as pltpu

_NEG_GATE = -1e30          # cross-window gate; far below any -1e9 mask value
_NT_DIMS = (((1,), (1,)), ((), ()))   # contract last dims: "nd,md->nm"


# ------------------------------ Pallas kernel ------------------------------- #
def _window_attn_kernel(*refs, scale, num_heads, has_mask):
    """One grid step processes WB windows packed into P = WB*N rows.

    refs (in order):
      q_ref, k_ref, v_ref : (P, C)   packed rows of WB windows (native dtype)
      bias_ref            : (H, P, P) f32, relative-position bias tiled over
                            the WB x WB window blocks + block-diagonal gate
                            (resident: constant index_map, DMA'd once)
      mask_ref (optional) : (1, P, P) f32, column-tiled shifted-window mask
                            for this step's mask pattern
      o_ref               : (P, C)
    """
    if has_mask:
        q_ref, k_ref, v_ref, bias_ref, mask_ref, o_ref = refs
    else:
        q_ref, k_ref, v_ref, bias_ref, o_ref = refs
        mask_ref = None

    P, C = q_ref.shape
    D = C // num_heads

    q = q_ref[...]                                  # (P, C)
    k = k_ref[...]
    v = v_ref[...]
    madd = mask_ref[0] if has_mask else None        # (P, P) f32, head-independent

    outs = []
    for h in range(num_heads):                      # static unroll; H is small
        sl = slice(h * D, (h + 1) * D)
        qh = q[:, sl]                               # (P, D)
        kh = k[:, sl]
        vh = v[:, sl]

        # Packed scores for all WB windows of this head: one lane-dense MXU
        # matmul instead of WB tiny (N, N) tiles.
        s = jax.lax.dot_general(qh, kh, _NT_DIMS,
                                preferred_element_type=jnp.float32)  # (P, P)
        s = s * scale + bias_ref[h]    # scale in f32; bias carries the gate
        if has_mask:
            s = s + madd

        # Numerically stable softmax.  Cross-window columns sit at ~-1e30 and
        # underflow to exactly 0 after exp, so this equals the per-window
        # softmax of the reference.
        s = s - jnp.max(s, axis=-1, keepdims=True)
        p = jnp.exp(s)
        l = jnp.sum(p, axis=-1, keepdims=True)      # >= 1, never zero

        o = jnp.dot(p.astype(v.dtype), vh,
                    preferred_element_type=jnp.float32)              # (P, D)
        outs.append(o * (1.0 / l))                  # exact normalization

    # One full-tile store per grid step (heads concatenated along lanes).
    o_ref[...] = jnp.concatenate(outs, axis=-1).astype(o_ref.dtype)


# ------------------------------ window picker ------------------------------- #
def _pick_window_block(B_, nW, N, H):
    """How many windows WB to pack per grid step.

    * WB must divide B_ and be compatible with the mask period (WB | nW or
      nW | WB) so every grid step sees exactly one mask pattern.
    * Prefer the smallest WB with 128 <= WB*N <= 256: lane-dense scores /
      softmax / PV, one native MXU pass, bounded O(WB^2) block-diagonal waste,
      and the longest grid (so double-buffered DMA overlaps and both v7x
      TensorCores get work).
    * Keep the resident (H, WB*N, WB*N) f32 bias under a conservative cap
      that is safe on v5e / v6e / v7x VMEM.
    """
    def feasible(w):
        return (B_ % w == 0 and (nW % w == 0 or w % nW == 0)
                and H * (w * N) ** 2 * 4 <= 8 * 1024 * 1024)

    cands = [w for w in range(1, B_ + 1) if feasible(w)]
    if not cands:
        return 1
    good = [w for w in cands if 128 <= w * N <= 256]
    if good:
        return min(good)
    small = [w for w in cands if w * N <= 256]
    return max(small) if small else min(cands)


# --------------------------------- wrapper ---------------------------------- #
def window_attention_pallas(q, k, v, rel_pos_bias, mask, scale):
    """q, k, v: (B_, N, C); rel_pos_bias: (H, N, N); mask: (nW, N, N) or None."""
    B_, N, C = q.shape
    H = rel_pos_bias.shape[0]
    assert C % H == 0
    nW = 1 if mask is None else mask.shape[0]
    assert B_ % nW == 0, "B_ must be a multiple of the number of mask windows"

    WB = _pick_window_block(B_, nW, N, H)
    assert B_ % WB == 0 and (nW % WB == 0 or WB % nW == 0)
    P = WB * N
    G = B_ // WB                                     # grid length

    # Resident additive bias: relative-position bias tiled over the WB x WB
    # window blocks plus the block-diagonal cross-window gate.
    r = jnp.arange(P) // N
    gate = jnp.where(r[:, None] == r[None, :], 0.0, _NEG_GATE).astype(jnp.float32)
    bias_add = jnp.tile(rel_pos_bias.astype(jnp.float32), (1, WB, WB)) + gate[None]

    # Packed-row layout for q/k/v/out (free contiguous reshape, no transpose).
    q2 = q.reshape(B_ * N, C)
    k2 = k.reshape(B_ * N, C)
    v2 = v.reshape(B_ * N, C)

    row_spec = pl.BlockSpec((P, C), lambda g: (g, 0))
    bias_spec = pl.BlockSpec((H, P, P), lambda g: (0, 0, 0))       # resident

    inputs = [q2, k2, v2, bias_add]
    in_specs = [row_spec, row_spec, row_spec, bias_spec]

    if mask is not None:
        # Head-independent mask patterns; one small (P, P) block per step.
        # Deliberately NOT pre-fused with the bias (that would scale HBM
        # traffic by nW and by H).
        if WB >= nW:
            mwin = jnp.tile(mask, (WB // nW, 1, 1))                 # (WB, N, N)
            n_patterns = 1
        else:
            mwin = mask                                             # (nW, N, N)
            n_patterns = nW // WB
        mrows = mwin.reshape(n_patterns, P, N).astype(jnp.float32)
        mask_add = jnp.tile(mrows, (1, 1, WB))                      # (n_pat, P, P)
        if n_patterns == 1:
            mask_spec = pl.BlockSpec((1, P, P), lambda g: (0, 0, 0))
        else:
            mask_spec = pl.BlockSpec((1, P, P),
                                     lambda g: (g % n_patterns, 0, 0))
        inputs.append(mask_add)
        in_specs.append(mask_spec)

    kernel = functools.partial(_window_attn_kernel, scale=scale,
                               num_heads=H, has_mask=mask is not None)

    out2 = pl.pallas_call(
        kernel,
        out_shape=jax.ShapeDtypeStruct((B_ * N, C), q.dtype),
        grid_spec=pltpu.PrefetchScalarGridSpec(
            num_scalar_prefetch=0,
            grid=(G,),
            in_specs=in_specs,
            out_specs=pl.BlockSpec((P, C), lambda g: (g, 0)),
        ),
        compiler_params=pltpu.CompilerParams(
            dimension_semantics=("parallel",)),
    )(*inputs)

    return out2.reshape(B_, N, C)


# ------------------------- parameter construction --------------------------- #
def make_relative_position_bias(key, window_size, num_heads):
    """Build (H, N, N) relative position bias, matching the PyTorch module."""
    Wh, Ww = window_size
    N = Wh * Ww
    table_size = (2 * Wh - 1) * (2 * Ww - 1)

    table = 0.02 * jax.random.truncated_normal(
        key, -2.0, 2.0, (table_size, num_heads), dtype=jnp.float32)

    coords = jnp.stack(jnp.meshgrid(jnp.arange(Wh), jnp.arange(Ww), indexing="ij"))
    coords_flatten = coords.reshape(2, -1)                               # (2, N)
    rel = coords_flatten[:, :, None] - coords_flatten[:, None, :]        # (2, N, N)
    rel = rel.transpose(1, 2, 0)                                         # (N, N, 2)
    idx = (rel[..., 0] + (Wh - 1)) * (2 * Ww - 1) + (rel[..., 1] + (Ww - 1))

    bias = table[idx.reshape(-1)].reshape(N, N, num_heads).transpose(2, 0, 1)
    return bias                                                          # (H, N, N)


# --------------------------- pure-JAX reference ------------------------------ #
def window_attention_ref(q, k, v, rel_pos_bias, mask, scale):
    B_, N, C = q.shape
    H = rel_pos_bias.shape[0]
    D = C // H
    hp = jax.lax.Precision.HIGHEST
    qh = q.reshape(B_, N, H, D).transpose(0, 2, 1, 3) * scale
    kh = k.reshape(B_, N, H, D).transpose(0, 2, 1, 3)
    vh = v.reshape(B_, N, H, D).transpose(0, 2, 1, 3)
    attn = jnp.einsum("bhnd,bhmd->bhnm", qh, kh, precision=hp)
    attn = attn + rel_pos_bias[None]
    if mask is not None:
        nW = mask.shape[0]
        attn = attn.reshape(B_ // nW, nW, H, N, N) + mask[None, :, None]
        attn = attn.reshape(B_, H, N, N)
    attn = jax.nn.softmax(attn, axis=-1)
    # attn_drop has p=0.0 -> identity
    out = jnp.einsum("bhnm,bhmd->bhnd", attn, vh, precision=hp)
    return out.transpose(0, 2, 1, 3).reshape(B_, N, C)


# ----------------------------------- main ------------------------------------ #
if __name__ == "__main__":
    dim = 32
    num_heads = 4
    head_dim = dim // num_heads
    window_size = (4, 4)
    N = window_size[0] * window_size[1]        # 16 tokens per window
    scale = head_dim ** (-0.5)

    key = jax.random.PRNGKey(0)
    k_tab, k_q, k_k, k_v, k_m, k_q3, k_k3, k_v3, k_m3 = jax.random.split(key, 9)

    rel_pos_bias = make_relative_position_bias(k_tab, window_size, num_heads)

    # Kernel MXU matmuls run at default TPU f32 precision (bf16 passes), the
    # reference runs at HIGHEST precision -> agreement is bf16-grade.
    TOL = dict(atol=2e-2, rtol=2e-2)

    # ---- case 1: shifted-window mask, WB >= nW (single mask pattern) -------
    nW, batch = 4, 2
    B_ = nW * batch
    q = jax.random.normal(k_q, (B_, N, dim), dtype=jnp.float32)
    k = jax.random.normal(k_k, (B_, N, dim), dtype=jnp.float32)
    v = jax.random.normal(k_v, (B_, N, dim), dtype=jnp.float32)
    mask_bits = jax.random.bernoulli(k_m, 0.2, (nW, N, N))
    mask = jnp.where(mask_bits, -1e9, 0.0).astype(jnp.float32)

    out = jax.block_until_ready(
        window_attention_pallas(q, k, v, rel_pos_bias, mask, scale))
    ref = window_attention_ref(q, k, v, rel_pos_bias, mask, scale)
    np.testing.assert_allclose(np.asarray(out), np.asarray(ref), **TOL)

    # ---- case 2: mask=None (no mask tensor is passed to the kernel) --------
    out_nm = jax.block_until_ready(
        window_attention_pallas(q, k, v, rel_pos_bias, None, scale))
    ref_nm = window_attention_ref(q, k, v, rel_pos_bias, None, scale)
    np.testing.assert_allclose(np.asarray(out_nm), np.asarray(ref_nm), **TOL)

    # ---- case 3: WB < nW -> multi-step grid + streamed mask patterns -------
    nW3, batch3 = 16, 2
    B3 = nW3 * batch3
    q3 = jax.random.normal(k_q3, (B3, N, dim), dtype=jnp.float32)
    k3 = jax.random.normal(k_k3, (B3, N, dim), dtype=jnp.float32)
    v3 = jax.random.normal(k_v3, (B3, N, dim), dtype=jnp.float32)
    mask3 = jnp.where(jax.random.bernoulli(k_m3, 0.2, (nW3, N, N)),
                      -1e9, 0.0).astype(jnp.float32)

    out3 = jax.block_until_ready(
        window_attention_pallas(q3, k3, v3, rel_pos_bias, mask3, scale))
    ref3 = window_attention_ref(q3, k3, v3, rel_pos_bias, mask3, scale)
    np.testing.assert_allclose(np.asarray(out3), np.asarray(ref3), **TOL)

    print("KERNEL_OK")
</pallas_src>

<mosaic_0001>
module attributes {stable_mosaic.version = 11 : i64} {
  func.func @_window_attn_kernel(%arg0: i32, %arg1: memref<128x32xf32, #tpu.memory_space<vmem>>, %arg2: memref<128x32xf32, #tpu.memory_space<vmem>>, %arg3: memref<128x32xf32, #tpu.memory_space<vmem>>, %arg4: memref<4x128x128xf32, #tpu.memory_space<vmem>>, %arg5: memref<1x128x128xf32, #tpu.memory_space<vmem>>, %arg6: memref<128x32xf32, #tpu.memory_space<vmem>>) attributes {dimension_semantics = [#tpu.dimension_semantics<parallel>], iteration_bounds = array<i64: 1>, scalar_prefetch = 0 : i64, scratch_operands = 0 : i64, tpu.core_type = #tpu.core_type<tc>, window_params = [{transform_indices = @transform_0, window_bounds = array<i64: 128, 32>}, {transform_indices = @transform_1, window_bounds = array<i64: 128, 32>}, {transform_indices = @transform_2, window_bounds = array<i64: 128, 32>}, {pipeline_mode = #tpu.pipeline_mode<synchronous>, transform_indices = @transform_3, window_bounds = array<i64: 4, 128, 128>}, {pipeline_mode = #tpu.pipeline_mode<synchronous>, transform_indices = @transform_4, window_bounds = array<i64: 1, 128, 128>}, {transform_indices = @transform_5, window_bounds = array<i64: 128, 32>}]} {
    %c0 = arith.constant 0 : index
    %c0_0 = arith.constant 0 : index
    %0 = vector.load %arg1[%c0, %c0_0] : memref<128x32xf32, #tpu.memory_space<vmem>>, vector<128x32xf32>
    %c0_1 = arith.constant 0 : index
    %c0_2 = arith.constant 0 : index
    %1 = vector.load %arg2[%c0_1, %c0_2] : memref<128x32xf32, #tpu.memory_space<vmem>>, vector<128x32xf32>
    %c0_3 = arith.constant 0 : index
    %c0_4 = arith.constant 0 : index
    %2 = vector.load %arg3[%c0_3, %c0_4] : memref<128x32xf32, #tpu.memory_space<vmem>>, vector<128x32xf32>
    %c0_5 = arith.constant 0 : index
    %c0_6 = arith.constant 0 : index
    %c0_7 = arith.constant 0 : index
    %3 = vector.load %arg5[%c0_5, %c0_6, %c0_7] : memref<1x128x128xf32, #tpu.memory_space<vmem>>, vector<1x128x128xf32>
    %4 = vector.shape_cast %3 : vector<1x128x128xf32> to vector<128x128xf32>
    %5 = vector.extract_strided_slice %0 {offsets = [0, 0], sizes = [128, 8], strides = [1, 1]} : vector<128x32xf32> to vector<128x8xf32>
    %6 = vector.extract_strided_slice %1 {offsets = [0, 0], sizes = [128, 8], strides = [1, 1]} : vector<128x32xf32> to vector<128x8xf32>
    %7 = vector.extract_strided_slice %2 {offsets = [0, 0], sizes = [128, 8], strides = [1, 1]} : vector<128x32xf32> to vector<128x8xf32>
    %cst = arith.constant dense<0.000000e+00> : vector<128x128xf32>
    %8 = tpu.matmul %5, %6, %cst {dimension_numbers = #tpu.dot_dimension_numbers<[1], [1], [0], [0], [0, 0, 1, 0], [], []>} : vector<128x8xf32>, vector<128x8xf32>, vector<128x128xf32> -> vector<128x128xf32>
    %cst_8 = arith.constant 0.353553385 : f32
    %9 = vector.broadcast %cst_8 : f32 to vector<128x128xf32>
    %10 = arith.mulf %8, %9 : vector<128x128xf32>
    %c0_9 = arith.constant 0 : index
    %c0_10 = arith.constant 0 : index
    %c0_11 = arith.constant 0 : index
    %11 = vector.load %arg4[%c0_9, %c0_10, %c0_11] : memref<4x128x128xf32, #tpu.memory_space<vmem>>, vector<1x128x128xf32>
    %12 = vector.shape_cast %11 : vector<1x128x128xf32> to vector<128x128xf32>
    %13 = arith.addf %10, %12 : vector<128x128xf32>
    %14 = arith.addf %13, %4 : vector<128x128xf32>
    %cst_12 = arith.constant dense<0xFF800000> : vector<128xf32>
    %15 = vector.multi_reduction <maximumf>, %14, %cst_12 [1] : vector<128x128xf32> to vector<128xf32>
    %16 = vector.shape_cast %15 : vector<128xf32> to vector<128x1xf32>
    %17 = vector.broadcast %16 : vector<128x1xf32> to vector<128x128xf32>
    %18 = arith.subf %14, %17 : vector<128x128xf32>
    %19 = math.exp %18 : vector<128x128xf32>
    %cst_13 = arith.constant dense<0.000000e+00> : vector<128xf32>
    %20 = vector.multi_reduction <add>, %19, %cst_13 [1] : vector<128x128xf32> to vector<128xf32>
    %21 = vector.shape_cast %20 : vector<128xf32> to vector<128x1xf32>
    %cst_14 = arith.constant dense<0.000000e+00> : vector<128x8xf32>
    %22 = tpu.matmul %19, %7, %cst_14 {dimension_numbers = #tpu.dot_dimension_numbers<[1], [0], [0], [1], [0, 0, 1, 1], [], []>} : vector<128x128xf32>, vector<128x8xf32>, vector<128x8xf32> -> vector<128x8xf32>
    %cst_15 = arith.constant 1.000000e+00 : f32
    %23 = vector.broadcast %cst_15 : f32 to vector<128x1xf32>
    %24 = arith.divf %23, %21 : vector<128x1xf32>
    %25 = vector.broadcast %24 : vector<128x1xf32> to vector<128x8xf32>
    %26 = arith.mulf %22, %25 : vector<128x8xf32>
    %27 = vector.extract_strided_slice %0 {offsets = [0, 8], sizes = [128, 8], strides = [1, 1]} : vector<128x32xf32> to vector<128x8xf32>
    %28 = vector.extract_strided_slice %1 {offsets = [0, 8], sizes = [128, 8], strides = [1, 1]} : vector<128x32xf32> to vector<128x8xf32>
    %29 = vector.extract_strided_slice %2 {offsets = [0, 8], sizes = [128, 8], strides = [1, 1]} : vector<128x32xf32> to vector<128x8xf32>
    %cst_16 = arith.constant dense<0.000000e+00> : vector<128x128xf32>
    %30 = tpu.matmul %27, %28, %cst_16 {dimension_numbers = #tpu.dot_dimension_numbers<[1], [1], [0], [0], [0, 0, 1, 0], [], []>} : vector<128x8xf32>, vector<128x8xf32>, vector<128x128xf32> -> vector<128x128xf32>
    %cst_17 = arith.constant 0.353553385 : f32
    %31 = vector.broadcast %cst_17 : f32 to vector<128x128xf32>
    %32 = arith.mulf %30, %31 : vector<128x128xf32>
    %c1 = arith.constant 1 : index
    %c0_18 = arith.constant 0 : index
    %c0_19 = arith.constant 0 : index
    %33 = vector.load %arg4[%c1, %c0_18, %c0_19] : memref<4x128x128xf32, #tpu.memory_space<vmem>>, vector<1x128x128xf32>
    %34 = vector.shape_cast %33 : vector<1x128x128xf32> to vector<128x128xf32>
    %35 = arith.addf %32, %34 : vector<128x128xf32>
    %36 = arith.addf %35, %4 : vector<128x128xf32>
    %cst_20 = arith.constant dense<0xFF800000> : vector<128xf32>
    %37 = vector.multi_reduction <maximumf>, %36, %cst_20 [1] : vector<128x128xf32> to vector<128xf32>
    %38 = vector.shape_cast %37 : vector<128xf32> to vector<128x1xf32>
    %39 = vector.broadcast %38 : vector<128x1xf32> to vector<128x128xf32>
    %40 = arith.subf %36, %39 : vector<128x128xf32>
    %41 = math.exp %40 : vector<128x128xf32>
    %cst_21 = arith.constant dense<0.000000e+00> : vector<128xf32>
    %42 = vector.multi_reduction <add>, %41, %cst_21 [1] : vector<128x128xf32> to vector<128xf32>
    %43 = vector.shape_cast %42 : vector<128xf32> to vector<128x1xf32>
    %cst_22 = arith.constant dense<0.000000e+00> : vector<128x8xf32>
    %44 = tpu.matmul %41, %29, %cst_22 {dimension_numbers = #tpu.dot_dimension_numbers<[1], [0], [0], [1], [0, 0, 1, 1], [], []>} : vector<128x128xf32>, vector<128x8xf32>, vector<128x8xf32> -> vector<128x8xf32>
    %cst_23 = arith.constant 1.000000e+00 : f32
    %45 = vector.broadcast %cst_23 : f32 to vector<128x1xf32>
    %46 = arith.divf %45, %43 : vector<128x1xf32>
    %47 = vector.broadcast %46 : vector<128x1xf32> to vector<128x8xf32>
    %48 = arith.mulf %44, %47 : vector<128x8xf32>
    %49 = vector.extract_strided_slice %0 {offsets = [0, 16], sizes = [128, 8], strides = [1, 1]} : vector<128x32xf32> to vector<128x8xf32>
    %50 = vector.extract_strided_slice %1 {offsets = [0, 16], sizes = [128, 8], strides = [1, 1]} : vector<128x32xf32> to vector<128x8xf32>
    %51 = vector.extract_strided_slice %2 {offsets = [0, 16], sizes = [128, 8], strides = [1, 1]} : vector<128x32xf32> to vector<128x8xf32>
    %cst_24 = arith.constant dense<0.000000e+00> : vector<128x128xf32>
    %52 = tpu.matmul %49, %50, %cst_24 {dimension_numbers = #tpu.dot_dimension_numbers<[1], [1], [0], [0], [0, 0, 1, 0], [], []>} : vector<128x8xf32>, vector<128x8xf32>, vector<128x128xf32> -> vector<128x128xf32>
    %cst_25 = arith.constant 0.353553385 : f32
    %53 = vector.broadcast %cst_25 : f32 to vector<128x128xf32>
    %54 = arith.mulf %52, %53 : vector<128x128xf32>
    %c2 = arith.constant 2 : index
    %c0_26 = arith.constant 0 : index
    %c0_27 = arith.constant 0 : index
    %55 = vector.load %arg4[%c2, %c0_26, %c0_27] : memref<4x128x128xf32, #tpu.memory_space<vmem>>, vector<1x128x128xf32>
    %56 = vector.shape_cast %55 : vector<1x128x128xf32> to vector<128x128xf32>
    %57 = arith.addf %54, %56 : vector<128x128xf32>
    %58 = arith.addf %57, %4 : vector<128x128xf32>
    %cst_28 = arith.constant dense<0xFF800000> : vector<128xf32>
    %59 = vector.multi_reduction <maximumf>, %58, %cst_28 [1] : vector<128x128xf32> to vector<128xf32>
    %60 = vector.shape_cast %59 : vector<128xf32> to vector<128x1xf32>
    %61 = vector.broadcast %60 : vector<128x1xf32> to vector<128x128xf32>
    %62 = arith.subf %58, %61 : vector<128x128xf32>
    %63 = math.exp %62 : vector<128x128xf32>
    %cst_29 = arith.constant dense<0.000000e+00> : vector<128xf32>
    %64 = vector.multi_reduction <add>, %63, %cst_29 [1] : vector<128x128xf32> to vector<128xf32>
    %65 = vector.shape_cast %64 : vector<128xf32> to vector<128x1xf32>
    %cst_30 = arith.constant dense<0.000000e+00> : vector<128x8xf32>
    %66 = tpu.matmul %63, %51, %cst_30 {dimension_numbers = #tpu.dot_dimension_numbers<[1], [0], [0], [1], [0, 0, 1, 1], [], []>} : vector<128x128xf32>, vector<128x8xf32>, vector<128x8xf32> -> vector<128x8xf32>
    %cst_31 = arith.constant 1.000000e+00 : f32
    %67 = vector.broadcast %cst_31 : f32 to vector<128x1xf32>
    %68 = arith.divf %67, %65 : vector<128x1xf32>
    %69 = vector.broadcast %68 : vector<128x1xf32> to vector<128x8xf32>
    %70 = arith.mulf %66, %69 : vector<128x8xf32>
    %71 = vector.extract_strided_slice %0 {offsets = [0, 24], sizes = [128, 8], strides = [1, 1]} : vector<128x32xf32> to vector<128x8xf32>
    %72 = vector.extract_strided_slice %1 {offsets = [0, 24], sizes = [128, 8], strides = [1, 1]} : vector<128x32xf32> to vector<128x8xf32>
    %73 = vector.extract_strided_slice %2 {offsets = [0, 24], sizes = [128, 8], strides = [1, 1]} : vector<128x32xf32> to vector<128x8xf32>
    %cst_32 = arith.constant dense<0.000000e+00> : vector<128x128xf32>
    %74 = tpu.matmul %71, %72, %cst_32 {dimension_numbers = #tpu.dot_dimension_numbers<[1], [1], [0], [0], [0, 0, 1, 0], [], []>} : vector<128x8xf32>, vector<128x8xf32>, vector<128x128xf32> -> vector<128x128xf32>
    %cst_33 = arith.constant 0.353553385 : f32
    %75 = vector.broadcast %cst_33 : f32 to vector<128x128xf32>
    %76 = arith.mulf %74, %75 : vector<128x128xf32>
    %c3 = arith.constant 3 : index
    %c0_34 = arith.constant 0 : index
    %c0_35 = arith.constant 0 : index
    %77 = vector.load %arg4[%c3, %c0_34, %c0_35] : memref<4x128x128xf32, #tpu.memory_space<vmem>>, vector<1x128x128xf32>
    %78 = vector.shape_cast %77 : vector<1x128x128xf32> to vector<128x128xf32>
    %79 = arith.addf %76, %78 : vector<128x128xf32>
    %80 = arith.addf %79, %4 : vector<128x128xf32>
    %cst_36 = arith.constant dense<0xFF800000> : vector<128xf32>
    %81 = vector.multi_reduction <maximumf>, %80, %cst_36 [1] : vector<128x128xf32> to vector<128xf32>
    %82 = vector.shape_cast %81 : vector<128xf32> to vector<128x1xf32>
    %83 = vector.broadcast %82 : vector<128x1xf32> to vector<128x128xf32>
    %84 = arith.subf %80, %83 : vector<128x128xf32>
    %85 = math.exp %84 : vector<128x128xf32>
    %cst_37 = arith.constant dense<0.000000e+00> : vector<128xf32>
    %86 = vector.multi_reduction <add>, %85, %cst_37 [1] : vector<128x128xf32> to vector<128xf32>
    %87 = vector.shape_cast %86 : vector<128xf32> to vector<128x1xf32>
    %cst_38 = arith.constant dense<0.000000e+00> : vector<128x8xf32>
    %88 = tpu.matmul %85, %73, %cst_38 {dimension_numbers = #tpu.dot_dimension_numbers<[1], [0], [0], [1], [0, 0, 1, 1], [], []>} : vector<128x128xf32>, vector<128x8xf32>, vector<128x8xf32> -> vector<128x8xf32>
    %cst_39 = arith.constant 1.000000e+00 : f32
    %89 = vector.broadcast %cst_39 : f32 to vector<128x1xf32>
    %90 = arith.divf %89, %87 : vector<128x1xf32>
    %91 = vector.broadcast %90 : vector<128x1xf32> to vector<128x8xf32>
    %92 = arith.mulf %88, %91 : vector<128x8xf32>
    %93 = tpu.concatenate %26, %48, %70, %92 in 1 : vector<128x8xf32>, vector<128x8xf32>, vector<128x8xf32>, vector<128x8xf32> -> vector<128x32xf32>
    %c0_40 = arith.constant 0 : index
    %c0_41 = arith.constant 0 : index
    %94 = vector.load %arg6[%c0_40, %c0_41] : memref<128x32xf32, #tpu.memory_space<vmem>>, vector<128x32xf32>
    tpu.vector_store %arg6[%c0_40, %c0_41], %93 {strides = array<i32>} : memref<128x32xf32, #tpu.memory_space<vmem>>, vector<128x32xf32>,
    return
  }
  func.func @transform_0(%arg0: i32) -> (i32, i32) {
    %c0_i32 = arith.constant 0 : i32
    %c0_i32_0 = arith.constant 0 : i32
    return %arg0, %c0_i32 : i32, i32
  }
  func.func @transform_1(%arg0: i32) -> (i32, i32) {
    %c0_i32 = arith.constant 0 : i32
    %c0_i32_0 = arith.constant 0 : i32
    return %arg0, %c0_i32 : i32, i32
  }
  func.func @transform_2(%arg0: i32) -> (i32, i32) {
    %c0_i32 = arith.constant 0 : i32
    %c0_i32_0 = arith.constant 0 : i32
    return %arg0, %c0_i32 : i32, i32
  }
  func.func @transform_3(%arg0: i32) -> (i32, i32, i32) {
    %c0_i32 = arith.constant 0 : i32
    %c0_i32_0 = arith.constant 0 : i32
    %c0_i32_1 = arith.constant 0 : i32
    %c0_i32_2 = arith.constant 0 : i32
    return %c0_i32, %c0_i32_0, %c0_i32_1 : i32, i32, i32
  }
  func.func @transform_4(%arg0: i32) -> (i32, i32, i32) {
    %c0_i32 = arith.constant 0 : i32
    %c0_i32_0 = arith.constant 0 : i32
    %c0_i32_1 = arith.constant 0 : i32
    %c0_i32_2 = arith.constant 0 : i32
    return %c0_i32, %c0_i32_0, %c0_i32_1 : i32, i32, i32
  }
  func.func @transform_5(%arg0: i32) -> (i32, i32) {
    %c0_i32 = arith.constant 0 : i32
    %c0_i32_0 = arith.constant 0 : i32
    return %arg0, %c0_i32 : i32, i32
  }
}

</mosaic_0001>

<llo_original>
// kernel: tpu_custom_call.1
$region0: #{tpu_custom_call.1}
  #allocation0 [shape = 'u32[]', space=smem, size = 0x4, offset = 0x4, fixed_abs, tag = 'smem constant byte address 0x4 - core index']
  #allocation1 [shape = 'u32[144,128]{1,0:T(1,128)}', space=vmem, size = 0x12000, scoped, tag = 'internal scratch']
  %s0 = inlined_call_operand.vmem [shape: f32[128,32], index: 0, kind: input, shape index: {}]
  %s1 = inlined_call_operand.vmem [shape: f32[128,32], index: 1, kind: input, shape index: {}]
  %s2 = inlined_call_operand.vmem [shape: f32[128,32], index: 2, kind: input, shape index: {}]
  %s3 = inlined_call_operand.hbm [shape: f32[4,128,128], index: 3, kind: input, shape index: {}]
  %s4 = inlined_call_operand.vmem [shape: f32[1,128,128], index: 4, kind: input, shape index: {}]
  %s5 = inlined_call_operand.vmem [shape: f32[128,32], index: 5, kind: output, shape index: {}]
  %s6 = sld [smem:[#allocation0]]
  $region34: #{tpu_custom_call.1} parent=0
    _
  %s8 = ssub.s32 1, %s6
  %s9 = scalar_select 0, %s8, %s6
  $region1: #{tpu_custom_call.1} parent=0
    #allocation2 [shape = 'u8[262144]{0}', space=vmem, size = 0x40000, scoped, tag = 'input window, operand 3, single buffered']
    #allocation3 [shape = 's32[1]{0}', space=sflag, size = 0x4, scoped, tag = 'scoped memory for tpu_custom_call.1']
    %10 = vsyncpa [#allocation3], 0
    // Predicated region
    $region2: #{tpu_custom_call.1} parent=1 // pred_check
      _
    $region3: #{tpu_custom_call.1} parent=1 // pred_check_branch
      %12 = sbr.rel (0) target = $region5
    $region4: #{tpu_custom_call.1} parent=1 // pred_region
      _
    $region5: #{tpu_custom_call.1} parent=1 // pred_fallthru
      _
    // Predicated region
    $region6: #{tpu_custom_call.1} parent=1 // pred_check
      _
    $region7: #{tpu_custom_call.1} parent=1 // pred_check_branch
      %14 = sbr.rel (0) target = $region9
    $region8: #{tpu_custom_call.1} parent=1 // pred_region
      _
    $region9: #{tpu_custom_call.1} parent=1 // pred_fallthru
      _
    // Predicated region
    $region10: #{tpu_custom_call.1} parent=1 // pred_check
      _
    $region11: #{tpu_custom_call.1} parent=1 // pred_check_branch
      %16 = sbr.rel (0) target = $region13
    $region12: #{tpu_custom_call.1} parent=1 // pred_region
      _
    $region13: #{tpu_custom_call.1} parent=1 // pred_fallthru
      _
    // Predicated region
    $region14: #{tpu_custom_call.1} parent=1 // pred_check
      _
    $region15: #{tpu_custom_call.1} parent=1 // pred_check_branch
      %18 = sbr.rel (0) target = $region17
    $region16: #{tpu_custom_call.1} parent=1 // pred_region
      %s20 = ssub.s32 8192, 8192
      %21 = vsyncadd [#allocation3], %s20
      %s22 = sshll.u32 [#allocation2], 4
      %s23 = int_to_ptr.vmem [resolvable:$true] %s22
      %28 = dma.hbm_to_vmem [thread:$0]  %s3, 8192, %s23, [#allocation3], 128, 128, 8
    $region17: #{tpu_custom_call.1} parent=1 // pred_fallthru
      _
    // Predicated region
    $region18: #{tpu_custom_call.1} parent=1 // pred_check
      _
    $region19: #{tpu_custom_call.1} parent=1 // pred_check_branch
      %30 = sbr.rel (0) target = $region21
    $region20: #{tpu_custom_call.1} parent=1 // pred_region
      _
    $region21: #{tpu_custom_call.1} parent=1 // pred_fallthru
      _
    // Predicated region
    $region22: #{tpu_custom_call.1} parent=1 // pred_check
      _
    $region23: #{tpu_custom_call.1} parent=1 // pred_check_branch
      %32 = sbr.rel (0) target = $region25
    $region24: #{tpu_custom_call.1} parent=1 // pred_region
      %33 = dma.done [#allocation3], 8192
    $region25: #{tpu_custom_call.1} parent=1 // pred_fallthru
      _
    %v34 = vld [vmem:[%s0] sm:$0xff]
    %v35 = vld [vmem:[%s0 + $0x8] sm:$0xff]
    %v36 = vld [vmem:[%s0 + $0x10] sm:$0xff]
    %v37 = vld [vmem:[%s0 + $0x18] sm:$0xff]
    %v38 = vld [vmem:[%s0 + $0x20] sm:$0xff]
    %v39 = vld [vmem:[%s0 + $0x28] sm:$0xff]
    %v40 = vld [vmem:[%s0 + $0x30] sm:$0xff]
    %v41 = vld [vmem:[%s0 + $0x38] sm:$0xff]
    %v42 = vld [vmem:[%s0 + $0x40] sm:$0xff]
    %v43 = vld [vmem:[%s0 + $0x48] sm:$0xff]
    %v44 = vld [vmem:[%s0 + $0x50] sm:$0xff]
    %v45 = vld [vmem:[%s0 + $0x58] sm:$0xff]
    %v46 = vld [vmem:[%s0 + $0x60] sm:$0xff]
    %v47 = vld [vmem:[%s0 + $0x68] sm:$0xff]
    %v48 = vld [vmem:[%s0 + $0x70] sm:$0xff]
    %v49 = vld [vmem:[%s0 + $0x78] sm:$0xff]
    %v50 = vld [vmem:[%s1] sm:$0xff]
    %v51 = vld [vmem:[%s1 + $0x8] sm:$0xff]
    %v52 = vld [vmem:[%s1 + $0x10] sm:$0xff]
    %v53 = vld [vmem:[%s1 + $0x18] sm:$0xff]
    %v54 = vld [vmem:[%s1 + $0x20] sm:$0xff]
    %v55 = vld [vmem:[%s1 + $0x28] sm:$0xff]
    %v56 = vld [vmem:[%s1 + $0x30] sm:$0xff]
    %v57 = vld [vmem:[%s1 + $0x38] sm:$0xff]
    %v58 = vld [vmem:[%s1 + $0x40] sm:$0xff]
    %v59 = vld [vmem:[%s1 + $0x48] sm:$0xff]
    %v60 = vld [vmem:[%s1 + $0x50] sm:$0xff]
    %v61 = vld [vmem:[%s1 + $0x58] sm:$0xff]
    %v62 = vld [vmem:[%s1 + $0x60] sm:$0xff]
    %v63 = vld [vmem:[%s1 + $0x68] sm:$0xff]
    %v64 = vld [vmem:[%s1 + $0x70] sm:$0xff]
    %v65 = vld [vmem:[%s1 + $0x78] sm:$0xff]
    %v66 = vld [vmem:[%s2] sm:$0xff]
    %v67 = vld [vmem:[%s2 + $0x8] sm:$0xff]
    %v68 = vld [vmem:[%s2 + $0x10] sm:$0xff]
    %v69 = vld [vmem:[%s2 + $0x18] sm:$0xff]
    %v70 = vld [vmem:[%s2 + $0x20] sm:$0xff]
    %v71 = vld [vmem:[%s2 + $0x28] sm:$0xff]
    %v72 = vld [vmem:[%s2 + $0x30] sm:$0xff]
    %v73 = vld [vmem:[%s2 + $0x38] sm:$0xff]
    %v74 = vld [vmem:[%s2 + $0x40] sm:$0xff]
    %v75 = vld [vmem:[%s2 + $0x48] sm:$0xff]
    %v76 = vld [vmem:[%s2 + $0x50] sm:$0xff]
    %v77 = vld [vmem:[%s2 + $0x58] sm:$0xff]
    %v78 = vld [vmem:[%s2 + $0x60] sm:$0xff]
    %v79 = vld [vmem:[%s2 + $0x68] sm:$0xff]
    %v80 = vld [vmem:[%s2 + $0x70] sm:$0xff]
    %v81 = vld [vmem:[%s2 + $0x78] sm:$0xff]
    %v82 = vld [vmem:[%s4] sm:$0xff]
    %v83 = vld [vmem:[%s4 + $0x8] sm:$0xff]
    %v84 = vld [vmem:[%s4 + $0x10] sm:$0xff]
    %v85 = vld [vmem:[%s4 + $0x18] sm:$0xff]
    %v86 = vld [vmem:[%s4 + $0x20] sm:$0xff]
    %v87 = vld [vmem:[%s4 + $0x28] sm:$0xff]
    %v88 = vld [vmem:[%s4 + $0x30] sm:$0xff]
    %v89 = vld [vmem:[%s4 + $0x38] sm:$0xff]
    %v90 = vld [vmem:[%s4 + $0x40] sm:$0xff]
    %v91 = vld [vmem:[%s4 + $0x48] sm:$0xff]
    %v92 = vld [vmem:[%s4 + $0x50] sm:$0xff]
    %v93 = vld [vmem:[%s4 + $0x58] sm:$0xff]
    %v94 = vld [vmem:[%s4 + $0x60] sm:$0xff]
    %v95 = vld [vmem:[%s4 + $0x68] sm:$0xff]
    %v96 = vld [vmem:[%s4 + $0x70] sm:$0xff]
    %v97 = vld [vmem:[%s4 + $0x78] sm:$0xff]
    %vm98 = vcmask 64512
    %v100 = vsel %vm98, %v34, 0
    %v103 = vsel %vm98, %v35, 0
    %v106 = vsel %vm98, %v36, 0
    %v109 = vsel %vm98, %v37, 0
    %v112 = vsel %vm98, %v38, 0
    %v115 = vsel %vm98, %v39, 0
    %v118 = vsel %vm98, %v40, 0
    %v121 = vsel %vm98, %v41, 0
    %v124 = vsel %vm98, %v42, 0
    %v127 = vsel %vm98, %v43, 0
    %v130 = vsel %vm98, %v44, 0
    %v133 = vsel %vm98, %v45, 0
    %v136 = vsel %vm98, %v46, 0
    %v139 = vsel %vm98, %v47, 0
    %v142 = vsel %vm98, %v48, 0
    %v145 = vsel %vm98, %v49, 0
    %v148 = vsel %vm98, %v50, 0
    %v151 = vsel %vm98, %v51, 0
    %v154 = vsel %vm98, %v52, 0
    %v157 = vsel %vm98, %v53, 0
    %v160 = vsel %vm98, %v54, 0
    %v163 = vsel %vm98, %v55, 0
    %v166 = vsel %vm98, %v56, 0
    %v169 = vsel %vm98, %v57, 0
    %v172 = vsel %vm98, %v58, 0
    %v175 = vsel %vm98, %v59, 0
    %v178 = vsel %vm98, %v60, 0
    %v181 = vsel %vm98, %v61, 0
    %v184 = vsel %vm98, %v62, 0
    %v187 = vsel %vm98, %v63, 0
    %v190 = vsel %vm98, %v64, 0
    %v193 = vsel %vm98, %v65, 0
    %195 = vmatprep.subr.mxu0 0.0
    %196 = vmatpush1.xpose.msra.mxu0 %v148
    %197 = vmatprep.subr.mxu0 0.0
    %198 = vmatpush1.xpose.msra.mxu0 %v151
    %199 = vmatprep.subr.mxu0 0.0
    %200 = vmatpush1.xpose.msra.mxu0 %v154
    %201 = vmatprep.subr.mxu0 0.0
    %202 = vmatpush1.xpose.msra.mxu0 %v157
    %203 = vmatprep.subr.mxu0 0.0
    %204 = vmatpush1.xpose.msra.mxu0 %v160
    %205 = vmatprep.subr.mxu0 0.0
    %206 = vmatpush1.xpose.msra.mxu0 %v163
    %207 = vmatprep.subr.mxu0 0.0
    %208 = vmatpush1.xpose.msra.mxu0 %v166
    %209 = vmatprep.subr.mxu0 0.0
    %210 = vmatpush1.xpose.msra.mxu0 %v169
    %211 = vmatprep.subr.mxu0 0.0
    %212 = vmatpush1.xpose.msra.mxu0 %v172
    %213 = vmatprep.subr.mxu0 0.0
    %214 = vmatpush1.xpose.msra.mxu0 %v175
    %215 = vmatprep.subr.mxu0 0.0
    %216 = vmatpush1.xpose.msra.mxu0 %v178
    %217 = vmatprep.subr.mxu0 0.0
    %218 = vmatpush1.xpose.msra.mxu0 %v181
    %219 = vmatprep.subr.mxu0 0.0
    %220 = vmatpush1.xpose.msra.mxu0 %v184
    %221 = vmatprep.subr.mxu0 0.0
    %222 = vmatpush1.xpose.msra.mxu0 %v187
    %223 = vmatprep.subr.mxu0 0.0
    %224 = vmatpush1.xpose.msra.mxu0 %v190
    %225 = vmatprep.subr.mxu0 0.0
    %226 = vmatpush1.xpose.msra.mxu0 %v193
    %227 = vmatprep.subr.mxu0 0.0
    %228 = vmatpush1.xpose.msra.mxu0 0.0
    %229 = vmatprep.subr.mxu0 0.0
    %230 = vmatpush1.xpose.msra.mxu0 0.0
    %231 = vmatprep.subr.mxu0 0.0
    %232 = vmatpush1.xpose.msra.mxu0 0.0
    %233 = vmatprep.subr.mxu0 0.0
    %234 = vmatpush1.xpose.msra.mxu0 0.0
    %235 = vmatprep.subr.mxu0 0.0
    %236 = vmatpush1.xpose.msra.mxu0 0.0
    %237 = vmatprep.subr.mxu0 0.0
    %238 = vmatpush1.xpose.msra.mxu0 0.0
    %239 = vmatprep.subr.mxu0 0.0
    %240 = vmatpush1.xpose.msra.mxu0 0.0
    %241 = vmatprep.subr.mxu0 0.0
    %242 = vmatpush1.xpose.msra.mxu0 0.0
    %243 = vmatprep.subr.mxu0 0.0
    %244 = vmatpush1.xpose.msra.mxu0 0.0
    %245 = vmatprep.subr.mxu0 0.0
    %246 = vmatpush1.xpose.msra.mxu0 0.0
    %247 = vmatprep.subr.mxu0 0.0
    %248 = vmatpush1.xpose.msra.mxu0 0.0
    %249 = vmatprep.subr.mxu0 0.0
    %250 = vmatpush1.xpose.msra.mxu0 0.0
    %251 = vmatprep.subr.mxu0 0.0
    %252 = vmatpush1.xpose.msra.mxu0 0.0
    %253 = vmatprep.subr.mxu0 0.0
    %254 = vmatpush1.xpose.msra.mxu0 0.0
    %255 = vmatprep.subr.mxu0 0.0
    %256 = vmatpush1.xpose.msra.mxu0 0.0
    %257 = vmatprep.subr.mxu0 0.0
    %258 = vmatpush1.xpose.msra.mxu0 0.0
    %259 = vmatprep.mubr.f32.mxu0 0.0
    %260 = vmatmul.mubr.f32.gmra.mrb[0].mxu0 %v100
    %v261 = vpop.f32.mrb[0].mxu0
    %v262 = vadd.f32 0.0, %v261
    %v263 = vpop.f32.mrb[0].mxu0
    %264 = vmatprep.mubr.f32.mxu0 0.0
    %265 = vmatmul.mubr.f32.gmra.mrb[0].mxu0 %v103
    %v266 = vpop.f32.mrb[0].mxu0
    %v267 = vadd.f32 0.0, %v266
    %v268 = vpop.f32.mrb[0].mxu0
    %269 = vmatprep.mubr.f32.mxu0 0.0
    %270 = vmatmul.mubr.f32.gmra.mrb[0].mxu0 %v106
    %v271 = vpop.f32.mrb[0].mxu0
    %v272 = vadd.f32 0.0, %v271
    %v273 = vpop.f32.mrb[0].mxu0
    %274 = vmatprep.mubr.f32.mxu0 0.0
    %275 = vmatmul.mubr.f32.gmra.mrb[0].mxu0 %v109
    %v276 = vpop.f32.mrb[0].mxu0
    %v277 = vadd.f32 0.0, %v276
    %v278 = vpop.f32.mrb[0].mxu0
    %279 = vmatprep.mubr.f32.mxu0 0.0
    %280 = vmatmul.mubr.f32.gmra.mrb[0].mxu0 %v112
    %v281 = vpop.f32.mrb[0].mxu0
    %v282 = vadd.f32 0.0, %v281
    %v283 = vpop.f32.mrb[0].mxu0
    %284 = vmatprep.mubr.f32.mxu0 0.0
    %285 = vmatmul.mubr.f32.gmra.mrb[0].mxu0 %v115
    %v286 = vpop.f32.mrb[0].mxu0
    %v287 = vadd.f32 0.0, %v286
    %v288 = vpop.f32.mrb[0].mxu0
    %289 = vmatprep.mubr.f32.mxu0 0.0
    %290 = vmatmul.mubr.f32.gmra.mrb[0].mxu0 %v118
    %v291 = vpop.f32.mrb[0].mxu0
    %v292 = vadd.f32 0.0, %v291
    %v293 = vpop.f32.mrb[0].mxu0
    %294 = vmatprep.mubr.f32.mxu0 0.0
    %295 = vmatmul.mubr.f32.gmra.mrb[0].mxu0 %v121
    %v296 = vpop.f32.mrb[0].mxu0
    %v297 = vadd.f32 0.0, %v296
    %v298 = vpop.f32.mrb[0].mxu0
    %299 = vmatprep.mubr.f32.mxu0 0.0
    %300 = vmatmul.mubr.f32.gmra.mrb[0].mxu0 %v124
    %v301 = vpop.f32.mrb[0].mxu0
    %v302 = vadd.f32 0.0, %v301
    %v303 = vpop.f32.mrb[0].mxu0
    %304 = vmatprep.mubr.f32.mxu0 0.0
    %305 = vmatmul.mubr.f32.gmra.mrb[0].mxu0 %v127
    %v306 = vpop.f32.mrb[0].mxu0
    %v307 = vadd.f32 0.0, %v306
    %v308 = vpop.f32.mrb[0].mxu0
    %309 = vmatprep.mubr.f32.mxu0 0.0
    %310 = vmatmul.mubr.f32.gmra.mrb[0].mxu0 %v130
    %v311 = vpop.f32.mrb[0].mxu0
    %v312 = vadd.f32 0.0, %v311
    %v313 = vpop.f32.mrb[0].mxu0
    %314 = vmatprep.mubr.f32.mxu0 0.0
    %315 = vmatmul.mubr.f32.gmra.mrb[0].mxu0 %v133
    %v316 = vpop.f32.mrb[0].mxu0
    %v317 = vadd.f32 0.0, %v316
    %v318 = vpop.f32.mrb[0].mxu0
    %319 = vmatprep.mubr.f32.mxu0 0.0
    %320 = vmatmul.mubr.f32.gmra.mrb[0].mxu0 %v136
    %v321 = vpop.f32.mrb[0].mxu0
    %v322 = vadd.f32 0.0, %v321
    %v323 = vpop.f32.mrb[0].mxu0
    %324 = vmatprep.mubr.f32.mxu0 0.0
    %325 = vmatmul.mubr.f32.gmra.mrb[0].mxu0 %v139
    %v326 = vpop.f32.mrb[0].mxu0
    %v327 = vadd.f32 0.0, %v326
    %v328 = vpop.f32.mrb[0].mxu0
    %329 = vmatprep.mubr.f32.mxu0 0.0
    %330 = vmatmul.mubr.f32.gmra.mrb[0].mxu0 %v142
    %v331 = vpop.f32.mrb[0].mxu0
    %v332 = vadd.f32 0.0, %v331
    %v333 = vpop.f32.mrb[0].mxu0
    %334 = vmatprep.mubr.f32.mxu0 0.0
    %335 = vmatmul.mubr.f32.gmra.mrb[0].mxu0 %v145
    %v336 = vpop.f32.mrb[0].mxu0
    %v337 = vadd.f32 0.0, %v336
    %v338 = vpop.f32.mrb[0].mxu0
    %339 = vdwg.mxu0
    %v340 = vmul.f32 %v262, 0.35355338
    %v341 = vmul.f32 %v267, 0.35355338
    %v342 = vmul.f32 %v272, 0.35355338
    %v343 = vmul.f32 %v277, 0.35355338
    %v344 = vmul.f32 %v282, 0.35355338
    %v345 = vmul.f32 %v287, 0.35355338
    %v346 = vmul.f32 %v292, 0.35355338
    %v347 = vmul.f32 %v297, 0.35355338
    %v348 = vmul.f32 %v302, 0.35355338
    %v349 = vmul.f32 %v307, 0.35355338
    %v350 = vmul.f32 %v312, 0.35355338
    %v351 = vmul.f32 %v317, 0.35355338
    %v352 = vmul.f32 %v322, 0.35355338
    %v353 = vmul.f32 %v327, 0.35355338
    %v354 = vmul.f32 %v332, 0.35355338
    %v355 = vmul.f32 %v337, 0.35355338
    %v356 = vld [vmem:[#allocation2] sm:$0xff]
    %v357 = vld [vmem:[#allocation2 + $0x8] sm:$0xff]
    %v358 = vld [vmem:[#allocation2 + $0x10] sm:$0xff]
    %v359 = vld [vmem:[#allocation2 + $0x18] sm:$0xff]
    %v360 = vld [vmem:[#allocation2 + $0x20] sm:$0xff]
    %v361 = vld [vmem:[#allocation2 + $0x28] sm:$0xff]
    %v362 = vld [vmem:[#allocation2 + $0x30] sm:$0xff]
    %v363 = vld [vmem:[#allocation2 + $0x38] sm:$0xff]
    %v364 = vld [vmem:[#allocation2 + $0x40] sm:$0xff]
    %v365 = vld [vmem:[#allocation2 + $0x48] sm:$0xff]
    %v366 = vld [vmem:[#allocation2 + $0x50] sm:$0xff]
    %v367 = vld [vmem:[#allocation2 + $0x58] sm:$0xff]
    %v368 = vld [vmem:[#allocation2 + $0x60] sm:$0xff]
    %v369 = vld [vmem:[#allocation2 + $0x68] sm:$0xff]
    %v370 = vld [vmem:[#allocation2 + $0x70] sm:$0xff]
    %v371 = vld [vmem:[#allocation2 + $0x78] sm:$0xff]
    %v372 = vadd.f32 %v340, %v356
    %v373 = vadd.f32 %v341, %v357
    %v374 = vadd.f32 %v342, %v358
    %v375 = vadd.f32 %v343, %v359
    %v376 = vadd.f32 %v344, %v360
    %v377 = vadd.f32 %v345, %v361
    %v378 = vadd.f32 %v346, %v362
    %v379 = vadd.f32 %v347, %v363
    %v380 = vadd.f32 %v348, %v364
    %v381 = vadd.f32 %v349, %v365
    %v382 = vadd.f32 %v350, %v366
    %v383 = vadd.f32 %v351, %v367
    %v384 = vadd.f32 %v352, %v368
    %v385 = vadd.f32 %v353, %v369
    %v386 = vadd.f32 %v354, %v370
    %v387 = vadd.f32 %v355, %v371
    %v388 = vadd.f32 %v372, %v82
    %v389 = vadd.f32 %v373, %v83
    %v390 = vadd.f32 %v374, %v84
    %v391 = vadd.f32 %v375, %v85
    %v392 = vadd.f32 %v376, %v86
    %v393 = vadd.f32 %v377, %v87
    %v394 = vadd.f32 %v378, %v88
    %v395 = vadd.f32 %v379, %v89
    %v396 = vadd.f32 %v380, %v90
    %v397 = vadd.f32 %v381, %v91
    %v398 = vadd.f32 %v382, %v92
    %v399 = vadd.f32 %v383, %v93
    %v400 = vadd.f32 %v384, %v94
    %v401 = vadd.f32 %v385, %v95
    %v402 = vadd.f32 %v386, %v96
    %v403 = vadd.f32 %v387, %v97
    %404 = vmax.xlane.f32.xlu0 %v388
    %v405 = vpop.xlane.xlu0 %404
    %406 = vmax.xlane.f32.xlu0 %v389
    %v407 = vpop.xlane.xlu0 %406
    %408 = vmax.xlane.f32.xlu0 %v390
    %v409 = vpop.xlane.xlu0 %408
    %410 = vmax.xlane.f32.xlu0 %v391
    %v411 = vpop.xlane.xlu0 %410
    %412 = vmax.xlane.f32.xlu0 %v392
    %v413 = vpop.xlane.xlu0 %412
    %414 = vmax.xlane.f32.xlu0 %v393
    %v415 = vpop.xlane.xlu0 %414
    %416 = vmax.xlane.f32.xlu0 %v394
    %v417 = vpop.xlane.xlu0 %416
    %418 = vmax.xlane.f32.xlu0 %v395
    %v419 = vpop.xlane.xlu0 %418
    %420 = vmax.xlane.f32.xlu0 %v396
    %v421 = vpop.xlane.xlu0 %420
    %422 = vmax.xlane.f32.xlu0 %v397
    %v423 = vpop.xlane.xlu0 %422
    %424 = vmax.xlane.f32.xlu0 %v398
    %v425 = vpop.xlane.xlu0 %424
    %426 = vmax.xlane.f32.xlu0 %v399
    %v427 = vpop.xlane.xlu0 %426
    %428 = vmax.xlane.f32.xlu0 %v400
    %v429 = vpop.xlane.xlu0 %428
    %430 = vmax.xlane.f32.xlu0 %v401
    %v431 = vpop.xlane.xlu0 %430
    %432 = vmax.xlane.f32.xlu0 %v402
    %v433 = vpop.xlane.xlu0 %432
    %434 = vmax.xlane.f32.xlu0 %v403
    %v435 = vpop.xlane.xlu0 %434
    %v436 = vsub.f32 %v388, %v405
    %v437 = vsub.f32 %v389, %v407
    %v438 = vsub.f32 %v390, %v409
    %v439 = vsub.f32 %v391, %v411
    %v440 = vsub.f32 %v392, %v413
    %v441 = vsub.f32 %v393, %v415
    %v442 = vsub.f32 %v394, %v417
    %v443 = vsub.f32 %v395, %v419
    %v444 = vsub.f32 %v396, %v421
    %v445 = vsub.f32 %v397, %v423
    %v446 = vsub.f32 %v398, %v425
    %v447 = vsub.f32 %v399, %v427
    %v448 = vsub.f32 %v400, %v429
    %v449 = vsub.f32 %v401, %v431
    %v450 = vsub.f32 %v402, %v433
    %v451 = vsub.f32 %v403, %v435
    %v452 = vmul.f32 %v436, 1.442695
    %v453 = vpow.pop %v452
    %v454 = vmul.f32 %v437, 1.442695
    %v455 = vpow.pop %v454
    %v456 = vmul.f32 %v438, 1.442695
    %v457 = vpow.pop %v456
    %v458 = vmul.f32 %v439, 1.442695
    %v459 = vpow.pop %v458
    %v460 = vmul.f32 %v440, 1.442695
    %v461 = vpow.pop %v460
    %v462 = vmul.f32 %v441, 1.442695
    %v463 = vpow.pop %v462
    %v464 = vmul.f32 %v442, 1.442695
    %v465 = vpow.pop %v464
    %v466 = vmul.f32 %v443, 1.442695
    %v467 = vpow.pop %v466
    %v468 = vmul.f32 %v444, 1.442695
    %v469 = vpow.pop %v468
    %v470 = vmul.f32 %v445, 1.442695
    %v471 = vpow.pop %v470
    %v472 = vmul.f32 %v446, 1.442695
    %v473 = vpow.pop %v472
    %v474 = vmul.f32 %v447, 1.442695
    %v475 = vpow.pop %v474
    %v476 = vmul.f32 %v448, 1.442695
    %v477 = vpow.pop %v476
    %v478 = vmul.f32 %v449, 1.442695
    %v479 = vpow.pop %v478
    %v480 = vmul.f32 %v450, 1.442695
    %v481 = vpow.pop %v480
    %v482 = vmul.f32 %v451, 1.442695
    %v483 = vpow.pop %v482
    %484 = vadd.xlane.f32.xlu0 %v453
    %v485 = vpop.xlane.xlu0 %484
    %486 = vadd.xlane.f32.xlu0 %v455
    %v487 = vpop.xlane.xlu0 %486
    %488 = vadd.xlane.f32.xlu0 %v457
    %v489 = vpop.xlane.xlu0 %488
    %490 = vadd.xlane.f32.xlu0 %v459
    %v491 = vpop.xlane.xlu0 %490
    %492 = vadd.xlane.f32.xlu0 %v461
    %v493 = vpop.xlane.xlu0 %492
    %494 = vadd.xlane.f32.xlu0 %v463
    %v495 = vpop.xlane.xlu0 %494
    %496 = vadd.xlane.f32.xlu0 %v465
    %v497 = vpop.xlane.xlu0 %496
    %498 = vadd.xlane.f32.xlu0 %v467
    %v499 = vpop.xlane.xlu0 %498
    %500 = vadd.xlane.f32.xlu0 %v469
    %v501 = vpop.xlane.xlu0 %500
    %502 = vadd.xlane.f32.xlu0 %v471
    %v503 = vpop.xlane.xlu0 %502
    %504 = vadd.xlane.f32.xlu0 %v473
    %v505 = vpop.xlane.xlu0 %504
    %506 = vadd.xlane.f32.xlu0 %v475
    %v507 = vpop.xlane.xlu0 %506
    %508 = vadd.xlane.f32.xlu0 %v477
    %v509 = vpop.xlane.xlu0 %508
    %510 = vadd.xlane.f32.xlu0 %v479
    %v511 = vpop.xlane.xlu0 %510
    %512 = vadd.xlane.f32.xlu0 %v481
    %v513 = vpop.xlane.xlu0 %512
    %514 = vadd.xlane.f32.xlu0 %v483
    %v515 = vpop.xlane.xlu0 %514
    %516 = vmatprep.subr.mxu0 0.0
    %517 = vmatpush1.msra.mxu0 %v66
    %518 = vmatprep.subr.mxu0 0.0
    %519 = vmatpush1.msra.mxu0 %v67
    %520 = vmatprep.subr.mxu0 0.0
    %521 = vmatpush1.msra.mxu0 %v68
    %522 = vmatprep.subr.mxu0 0.0
    %523 = vmatpush1.msra.mxu0 %v69
    %524 = vmatprep.subr.mxu0 0.0
    %525 = vmatpush1.msra.mxu0 %v70
    %526 = vmatprep.subr.mxu0 0.0
    %527 = vmatpush1.msra.mxu0 %v71
    %528 = vmatprep.subr.mxu0 0.0
    %529 = vmatpush1.msra.mxu0 %v72
    %530 = vmatprep.subr.mxu0 0.0
    %531 = vmatpush1.msra.mxu0 %v73
    %532 = vmatprep.subr.mxu0 0.0
    %533 = vmatpush1.msra.mxu0 %v74
    %534 = vmatprep.subr.mxu0 0.0
    %535 = vmatpush1.msra.mxu0 %v75
    %536 = vmatprep.subr.mxu0 0.0
    %537 = vmatpush1.msra.mxu0 %v76
    %538 = vmatprep.subr.mxu0 0.0
    %539 = vmatpush1.msra.mxu0 %v77
    %540 = vmatprep.subr.mxu0 0.0
    %541 = vmatpush1.msra.mxu0 %v78
    %542 = vmatprep.subr.mxu0 0.0
    %543 = vmatpush1.msra.mxu0 %v79
    %544 = vmatprep.subr.mxu0 0.0
    %545 = vmatpush1.msra.mxu0 %v80
    %546 = vmatprep.subr.mxu0 0.0
    %547 = vmatpush1.msra.mxu0 %v81
    %548 = vmatprep.subr.mxu0 0.0
    %549 = vmatpush1.msra.mxu0 0.0
    %550 = vmatprep.subr.mxu0 0.0
    %551 = vmatpush1.msra.mxu0 0.0
    %552 = vmatprep.subr.mxu0 0.0
    %553 = vmatpush1.msra.mxu0 0.0
    %554 = vmatprep.subr.mxu0 0.0
    %555 = vmatpush1.msra.mxu0 0.0
    %556 = vmatprep.subr.mxu0 0.0
    %557 = vmatpush1.msra.mxu0 0.0
    %558 = vmatprep.subr.mxu0 0.0
    %559 = vmatpush1.msra.mxu0 0.0
    %560 = vmatprep.subr.mxu0 0.0
    %561 = vmatpush1.msra.mxu0 0.0
    %562 = vmatprep.subr.mxu0 0.0
    %563 = vmatpush1.msra.mxu0 0.0
    %564 = vmatprep.subr.mxu0 0.0
    %565 = vmatpush1.msra.mxu0 0.0
    %566 = vmatprep.subr.mxu0 0.0
    %567 = vmatpush1.msra.mxu0 0.0
    %568 = vmatprep.subr.mxu0 0.0
    %569 = vmatpush1.msra.mxu0 0.0
    %570 = vmatprep.subr.mxu0 0.0
    %571 = vmatpush1.msra.mxu0 0.0
    %572 = vmatprep.subr.mxu0 0.0
    %573 = vmatpush1.msra.mxu0 0.0
    %574 = vmatprep.subr.mxu0 0.0
    %575 = vmatpush1.msra.mxu0 0.0
    %576 = vmatprep.subr.mxu0 0.0
    %577 = vmatpush1.msra.mxu0 0.0
    %578 = vmatprep.subr.mxu0 0.0
    %579 = vmatpush1.msra.mxu0 0.0
    %580 = vmatprep.mubr.f32.mxu0 0.0
    %581 = vmatmul.mubr.f32.gmra.mrb[0].mxu0 %v453
    %v582 = vpop.f32.mrb[0].mxu0
    %v583 = vadd.f32 0.0, %v582
    %v584 = vpop.f32.mrb[0].mxu0
    %585 = vmatprep.mubr.f32.mxu0 0.0
    %586 = vmatmul.mubr.f32.gmra.mrb[0].mxu0 %v455
    %v587 = vpop.f32.mrb[0].mxu0
    %v588 = vadd.f32 0.0, %v587
    %v589 = vpop.f32.mrb[0].mxu0
    %590 = vmatprep.mubr.f32.mxu0 0.0
    %591 = vmatmul.mubr.f32.gmra.mrb[0].mxu0 %v457
    %v592 = vpop.f32.mrb[0].mxu0
    %v593 = vadd.f32 0.0, %v592
    %v594 = vpop.f32.mrb[0].mxu0
    %595 = vmatprep.mubr.f32.mxu0 0.0
    %596 = vmatmul.mubr.f32.gmra.mrb[0].mxu0 %v459
    %v597 = vpop.f32.mrb[0].mxu0
    %v598 = vadd.f32 0.0, %v597
    %v599 = vpop.f32.mrb[0].mxu0
    %600 = vmatprep.mubr.f32.mxu0 0.0
    %601 = vmatmul.mubr.f32.gmra.mrb[0].mxu0 %v461
    %v602 = vpop.f32.mrb[0].mxu0
    %v603 = vadd.f32 0.0, %v602
    %v604 = vpop.f32.mrb[0].mxu0
    %605 = vmatprep.mubr.f32.mxu0 0.0
    %606 = vmatmul.mubr.f32.gmra.mrb[0].mxu0 %v463
    %v607 = vpop.f32.mrb[0].mxu0
    %v608 = vadd.f32 0.0, %v607
    %v609 = vpop.f32.mrb[0].mxu0
    %610 = vmatprep.mubr.f32.mxu0 0.0
    %611 = vmatmul.mubr.f32.gmra.mrb[0].mxu0 %v465
    %v612 = vpop.f32.mrb[0].mxu0
    %v613 = vadd.f32 0.0, %v612
    %v614 = vpop.f32.mrb[0].mxu0
    %615 = vmatprep.mubr.f32.mxu0 0.0
    %616 = vmatmul.mubr.f32.gmra.mrb[0].mxu0 %v467
    %v617 = vpop.f32.mrb[0].mxu0
    %v618 = vadd.f32 0.0, %v617
    %v619 = vpop.f32.mrb[0].mxu0
    %620 = vmatprep.mubr.f32.mxu0 0.0
    %621 = vmatmul.mubr.f32.gmra.mrb[0].mxu0 %v469
    %v622 = vpop.f32.mrb[0].mxu0
    %v623 = vadd.f32 0.0, %v622
    %v624 = vpop.f32.mrb[0].mxu0
    %625 = vmatprep.mubr.f32.mxu0 0.0
    %626 = vmatmul.mubr.f32.gmra.mrb[0].mxu0 %v471
    %v627 = vpop.f32.mrb[0].mxu0
    %v628 = vadd.f32 0.0, %v627
    %v629 = vpop.f32.mrb[0].mxu0
    %630 = vmatprep.mubr.f32.mxu0 0.0
    %631 = vmatmul.mubr.f32.gmra.mrb[0].mxu0 %v473
    %v632 = vpop.f32.mrb[0].mxu0
    %v633 = vadd.f32 0.0, %v632
    %v634 = vpop.f32.mrb[0].mxu0
    %635 = vmatprep.mubr.f32.mxu0 0.0
    %636 = vmatmul.mubr.f32.gmra.mrb[0].mxu0 %v475
    %v637 = vpop.f32.mrb[0].mxu0
    %v638 = vadd.f32 0.0, %v637
    %v639 = vpop.f32.mrb[0].mxu0
    %640 = vmatprep.mubr.f32.mxu0 0.0
    %641 = vmatmul.mubr.f32.gmra.mrb[0].mxu0 %v477
    %v642 = vpop.f32.mrb[0].mxu0
    %v643 = vadd.f32 0.0, %v642
    %v644 = vpop.f32.mrb[0].mxu0
    %645 = vmatprep.mubr.f32.mxu0 0.0
    %646 = vmatmul.mubr.f32.gmra.mrb[0].mxu0 %v479
    %v647 = vpop.f32.mrb[0].mxu0
    %v648 = vadd.f32 0.0, %v647
    %v649 = vpop.f32.mrb[0].mxu0
    %650 = vmatprep.mubr.f32.mxu0 0.0
    %651 = vmatmul.mubr.f32.gmra.mrb[0].mxu0 %v481
    %v652 = vpop.f32.mrb[0].mxu0
    %v653 = vadd.f32 0.0, %v652
    %v654 = vpop.f32.mrb[0].mxu0
    %655 = vmatprep.mubr.f32.mxu0 0.0
    %656 = vmatmul.mubr.f32.gmra.mrb[0].mxu0 %v483
    %v657 = vpop.f32.mrb[0].mxu0
    %v658 = vadd.f32 0.0, %v657
    %v659 = vpop.f32.mrb[0].mxu0
    %660 = vdwg.mxu0
    %v661 = vrcp.pop %v485
    %v662 = vmul.f32 1.0, %v661
    %v663 = vrcp.pop %v487
    %v664 = vmul.f32 1.0, %v663
    %v665 = vrcp.pop %v489
    %v666 = vmul.f32 1.0, %v665
    %v667 = vrcp.pop %v491
    %v668 = vmul.f32 1.0, %v667
    %v669 = vrcp.pop %v493
    %v670 = vmul.f32 1.0, %v669
    %v671 = vrcp.pop %v495
    %v672 = vmul.f32 1.0, %v671
    %v673 = vrcp.pop %v497
    %v674 = vmul.f32 1.0, %v673
    %v675 = vrcp.pop %v499
    %v676 = vmul.f32 1.0, %v675
    %v677 = vrcp.pop %v501
    %v678 = vmul.f32 1.0, %v677
    %v679 = vrcp.pop %v503
    %v680 = vmul.f32 1.0, %v679
    %v681 = vrcp.pop %v505
    %v682 = vmul.f32 1.0, %v681
    %v683 = vrcp.pop %v507
    %v684 = vmul.f32 1.0, %v683
    %v685 = vrcp.pop %v509
    %v686 = vmul.f32 1.0, %v685
    %v687 = vrcp.pop %v511
    %v688 = vmul.f32 1.0, %v687
    %v689 = vrcp.pop %v513
    %v690 = vmul.f32 1.0, %v689
    %v691 = vrcp.pop %v515
    %v692 = vmul.f32 1.0, %v691
    %v693 = vmul.f32 %v583, %v662
    %v694 = vmul.f32 %v588, %v664
    %v695 = vmul.f32 %v593, %v666
    %v696 = vmul.f32 %v598, %v668
    %v697 = vmul.f32 %v603, %v670
    %v698 = vmul.f32 %v608, %v672
    %v699 = vmul.f32 %v613, %v674
    %v700 = vmul.f32 %v618, %v676
    %v701 = vmul.f32 %v623, %v678
    %v702 = vmul.f32 %v628, %v680
    %v703 = vmul.f32 %v633, %v682
    %v704 = vmul.f32 %v638, %v684
    %v705 = vmul.f32 %v643, %v686
    %v706 = vmul.f32 %v648, %v688
    %v707 = vmul.f32 %v653, %v690
    %v708 = vmul.f32 %v658, %v692
    %709 = vrot.lane.b32.xlu0 %v34, 120
    %v710 = vpop.permute.xlu0 %709
    %711 = vrot.lane.b32.xlu0 %v35, 120
    %v712 = vpop.permute.xlu0 %711
    %713 = vrot.lane.b32.xlu0 %v36, 120
    %v714 = vpop.permute.xlu0 %713
    %715 = vrot.lane.b32.xlu0 %v37, 120
    %v716 = vpop.permute.xlu0 %715
    %717 = vrot.lane.b32.xlu0 %v38, 120
    %v718 = vpop.permute.xlu0 %717
    %719 = vrot.lane.b32.xlu0 %v39, 120
    %v720 = vpop.permute.xlu0 %719
    %721 = vrot.lane.b32.xlu0 %v40, 120
    %v722 = vpop.permute.xlu0 %721
    %723 = vrot.lane.b32.xlu0 %v41, 120
    %v724 = vpop.permute.xlu0 %723
    %725 = vrot.lane.b32.xlu0 %v42, 120
    %v726 = vpop.permute.xlu0 %725
    %727 = vrot.lane.b32.xlu0 %v43, 120
    %v728 = vpop.permute.xlu0 %727
    %729 = vrot.lane.b32.xlu0 %v44, 120
    %v730 = vpop.permute.xlu0 %729
    %731 = vrot.lane.b32.xlu0 %v45, 120
    %v732 = vpop.permute.xlu0 %731
    %733 = vrot.lane.b32.xlu0 %v46, 120
    %v734 = vpop.permute.xlu0 %733
    %735 = vrot.lane.b32.xlu0 %v47, 120
    %v736 = vpop.permute.xlu0 %735
    %737 = vrot.lane.b32.xlu0 %v48, 120
    %v738 = vpop.permute.xlu0 %737
    %739 = vrot.lane.b32.xlu0 %v49, 120
    %v740 = vpop.permute.xlu0 %739
    %741 = vrot.lane.b32.xlu0 %v50, 120
    %v742 = vpop.permute.xlu0 %741
    %743 = vrot.lane.b32.xlu0 %v51, 120
    %v744 = vpop.permute.xlu0 %743
    %745 = vrot.lane.b32.xlu0 %v52, 120
    %v746 = vpop.permute.xlu0 %745
    %747 = vrot.lane.b32.xlu0 %v53, 120
    %v748 = vpop.permute.xlu0 %747
    %749 = vrot.lane.b32.xlu0 %v54, 120
    %v750 = vpop.permute.xlu0 %749
    %751 = vrot.lane.b32.xlu0 %v55, 120
    %v752 = vpop.permute.xlu0 %751
    %753 = vrot.lane.b32.xlu0 %v56, 120
    %v754 = vpop.permute.xlu0 %753
    %755 = vrot.lane.b32.xlu0 %v57, 120
    %v756 = vpop.permute.xlu0 %755
    %757 = vrot.lane.b32.xlu0 %v58, 120
    %v758 = vpop.permute.xlu0 %757
    %759 = vrot.lane.b32.xlu0 %v59, 120
    %v760 = vpop.permute.xlu0 %759
    %761 = vrot.lane.b32.xlu0 %v60, 120
    %v762 = vpop.permute.xlu0 %761
    %763 = vrot.lane.b32.xlu0 %v61, 120
    %v764 = vpop.permute.xlu0 %763
    %765 = vrot.lane.b32.xlu0 %v62, 120
    %v766 = vpop.permute.xlu0 %765
    %767 = vrot.lane.b32.xlu0 %v63, 120
    %v768 = vpop.permute.xlu0 %767
    %769 = vrot.lane.b32.xlu0 %v64, 120
    %v770 = vpop.permute.xlu0 %769
    %771 = vrot.lane.b32.xlu0 %v65, 120
    %v772 = vpop.permute.xlu0 %771
    %v773 = vsel %vm98, %v710, 0
    %v775 = vsel %vm98, %v712, 0
    %v777 = vsel %vm98, %v714, 0
    %v779 = vsel %vm98, %v716, 0
    %v781 = vsel %vm98, %v718, 0
    %v783 = vsel %vm98, %v720, 0
    %v785 = vsel %vm98, %v722, 0
    %v787 = vsel %vm98, %v724, 0
    %v789 = vsel %vm98, %v726, 0
    %v791 = vsel %vm98, %v728, 0
    %v793 = vsel %vm98, %v730, 0
    %v795 = vsel %vm98, %v732, 0
    %v797 = vsel %vm98, %v734, 0
    %v799 = vsel %vm98, %v736, 0
    %v801 = vsel %vm98, %v738, 0
    %v803 = vsel %vm98, %v740, 0
    %v805 = vsel %vm98, %v742, 0
    %v807 = vsel %vm98, %v744, 0
    %v809 = vsel %vm98, %v746, 0
    %v811 = vsel %vm98, %v748, 0
    %v813 = vsel %vm98, %v750, 0
    %v815 = vsel %vm98, %v752, 0
    %v817 = vsel %vm98, %v754, 0
    %v819 = vsel %vm98, %v756, 0
    %v821 = vsel %vm98, %v758, 0
    %v823 = vsel %vm98, %v760, 0
    %v825 = vsel %vm98, %v762, 0
    %v827 = vsel %vm98, %v764, 0
    %v829 = vsel %vm98, %v766, 0
    %v831 = vsel %vm98, %v768, 0
    %v833 = vsel %vm98, %v770, 0
    %v835 = vsel %vm98, %v772, 0
    %837 = vmatprep.subr.mxu0 0.0
    %838 = vmatpush1.xpose.msra.mxu0 %v805
    %839 = vmatprep.subr.mxu0 0.0
    %840 = vmatpush1.xpose.msra.mxu0 %v807
    %841 = vmatprep.subr.mxu0 0.0
    %842 = vmatpush1.xpose.msra.mxu0 %v809
    %843 = vmatprep.subr.mxu0 0.0
    %844 = vmatpush1.xpose.msra.mxu0 %v811
    %845 = vmatprep.subr.mxu0 0.0
    %846 = vmatpush1.xpose.msra.mxu0 %v813
    %847 = vmatprep.subr.mxu0 0.0
    %848 = vmatpush1.xpose.msra.mxu0 %v815
    %849 = vmatprep.subr.mxu0 0.0
    %850 = vmatpush1.xpose.msra.mxu0 %v817
    %851 = vmatprep.subr.mxu0 0.0
    %852 = vmatpush1.xpose.msra.mxu0 %v819
    %853 = vmatprep.subr.mxu0 0.0
    %854 = vmatpush1.xpose.msra.mxu0 %v821
    %855 = vmatprep.subr.mxu0 0.0
    %856 = vmatpush1.xpose.msra.mxu0 %v823
    %857 = vmatprep.subr.mxu0 0.0
    %858 = vmatpush1.xpose.msra.mxu0 %v825
    %859 = vmatprep.subr.mxu0 0.0
    %860 = vmatpush1.xpose.msra.mxu0 %v827
    %861 = vmatprep.subr.mxu0 0.0
    %862 = vmatpush1.xpose.msra.mxu0 %v829
    %863 = vmatprep.subr.mxu0 0.0
    %864 = vmatpush1.xpose.msra.mxu0 %v831
    %865 = vmatprep.subr.mxu0 0.0
    %866 = vmatpush1.xpose.msra.mxu0 %v833
    %867 = vmatprep.subr.mxu0 0.0
    %868 = vmatpush1.xpose.msra.mxu0 %v835
    %869 = vmatprep.subr.mxu0 0.0
    %870 = vmatpush1.xpose.msra.mxu0 0.0
    %871 = vmatprep.subr.mxu0 0.0
    %872 = vmatpush1.xpose.msra.mxu0 0.0
    %873 = vmatprep.subr.mxu0 0.0
    %874 = vmatpush1.xpose.msra.mxu0 0.0
    %875 = vmatprep.subr.mxu0 0.0
    %876 = vmatpush1.xpose.msra.mxu0 0.0
    %877 = vmatprep.subr.mxu0 0.0
    %878 = vmatpush1.xpose.msra.mxu0 0.0
    %879 = vmatprep.subr.mxu0 0.0
    %880 = vmatpush1.xpose.msra.mxu0 0.0
    %881 = vmatprep.subr.mxu0 0.0
    %882 = vmatpush1.xpose.msra.mxu0 0.0
    %883 = vmatprep.subr.mxu0 0.0
    %884 = vmatpush1.xpose.msra.mxu0 0.0
    %885 = vmatprep.subr.mxu0 0.0
    %886 = vmatpush1.xpose.msra.mxu0 0.0
    %887 = vmatprep.subr.mxu0 0.0
    %888 = vmatpush1.xpose.msra.mxu0 0.0
    %889 = vmatprep.subr.mxu0 0.0
    %890 = vmatpush1.xpose.msra.mxu0 0.0
    %891 = vmatprep.subr.mxu0 0.0
    %892 = vmatpush1.xpose.msra.mxu0 0.0
    %893 = vmatprep.subr.mxu0 0.0
    %894 = vmatpush1.xpose.msra.mxu0 0.0
    %895 = vmatprep.subr.mxu0 0.0
    %896 = vmatpush1.xpose.msra.mxu0 0.0
    %897 = vmatprep.subr.mxu0 0.0
    %898 = vmatpush1.xpose.msra.mxu0 0.0
    %899 = vmatprep.subr.mxu0 0.0
    %900 = vmatpush1.xpose.msra.mxu0 0.0
    %901 = vmatprep.mubr.f32.mxu0 0.0
    %902 = vmatmul.mubr.f32.gmra.mrb[0].mxu0 %v773
    %v903 = vpop.f32.mrb[0].mxu0
    %v904 = vadd.f32 0.0, %v903
    %v905 = vpop.f32.mrb[0].mxu0
    %906 = vmatprep.mubr.f32.mxu0 0.0
    %907 = vmatmul.mubr.f32.gmra.mrb[0].mxu0 %v775
    %v908 = vpop.f32.mrb[0].mxu0
    %v909 = vadd.f32 0.0, %v908
    %v910 = vpop.f32.mrb[0].mxu0
    %911 = vmatprep.mubr.f32.mxu0 0.0
    %912 = vmatmul.mubr.f32.gmra.mrb[0].mxu0 %v777
    %v913 = vpop.f32.mrb[0].mxu0
    %v914 = vadd.f32 0.0, %v913
    %v915 = vpop.f32.mrb[0].mxu0
    %916 = vmatprep.mubr.f32.mxu0 0.0
    %917 = vmatmul.mubr.f32.gmra.mrb[0].mxu0 %v779
    %v918 = vpop.f32.mrb[0].mxu0
    %v919 = vadd.f32 0.0, %v918
    %v920 = vpop.f32.mrb[0].mxu0
    %921 = vmatprep.mubr.f32.mxu0 0.0
    %922 = vmatmul.mubr.f32.gmra.mrb[0].mxu0 %v781
    %v923 = vpop.f32.mrb[0].mxu0
    %v924 = vadd.f32 0.0, %v923
    %v925 = vpop.f32.mrb[0].mxu0
    %926 = vmatprep.mubr.f32.mxu0 0.0
    %927 = vmatmul.mubr.f32.gmra.mrb[0].mxu0 %v783
    %v928 = vpop.f32.mrb[0].mxu0
    %v929 = vadd.f32 0.0, %v928
    %v930 = vpop.f32.mrb[0].mxu0
    %931 = vmatprep.mubr.f32.mxu0 0.0
    %932 = vmatmul.mubr.f32.gmra.mrb[0].mxu0 %v785
    %v933 = vpop.f32.mrb[0].mxu0
    %v934 = vadd.f32 0.0, %v933
    %v935 = vpop.f32.mrb[0].mxu0
    %936 = vmatprep.mubr.f32.mxu0 0.0
    %937 = vmatmul.mubr.f32.gmra.mrb[0].mxu0 %v787
    %v938 = vpop.f32.mrb[0].mxu0
    %v939 = vadd.f32 0.0, %v938
    %v940 = vpop.f32.mrb[0].mxu0
    %941 = vmatprep.mubr.f32.mxu0 0.0
    %942 = vmatmul.mubr.f32.gmra.mrb[0].mxu0 %v789
    %v943 = vpop.f32.mrb[0].mxu0
    %v944 = vadd.f32 0.0, %v943
    %v945 = vpop.f32.mrb[0].mxu0
    %946 = vmatprep.mubr.f32.mxu0 0.0
    %947 = vmatmul.mubr.f32.gmra.mrb[0].mxu0 %v791
    %v948 = vpop.f32.mrb[0].mxu0
    %v949 = vadd.f32 0.0, %v948
    %v950 = vpop.f32.mrb[0].mxu0
    %951 = vmatprep.mubr.f32.mxu0 0.0
    %952 = vmatmul.mubr.f32.gmra.mrb[0].mxu0 %v793
    %v953 = vpop.f32.mrb[0].mxu0
    %v954 = vadd.f32 0.0, %v953
    %v955 = vpop.f32.mrb[0].mxu0
    %956 = vmatprep.mubr.f32.mxu0 0.0
    %957 = vmatmul.mubr.f32.gmra.mrb[0].mxu0 %v795
    %v958 = vpop.f32.mrb[0].mxu0
    %v959 = vadd.f32 0.0, %v958
    %v960 = vpop.f32.mrb[0].mxu0
    %961 = vmatprep.mubr.f32.mxu0 0.0
    %962 = vmatmul.mubr.f32.gmra.mrb[0].mxu0 %v797
    %v963 = vpop.f32.mrb[0].mxu0
    %v964 = vadd.f32 0.0, %v963
    %v965 = vpop.f32.mrb[0].mxu0
    %966 = vmatprep.mubr.f32.mxu0 0.0
    %967 = vmatmul.mubr.f32.gmra.mrb[0].mxu0 %v799
    %v968 = vpop.f32.mrb[0].mxu0
    %v969 = vadd.f32 0.0, %v968
    %v970 = vpop.f32.mrb[0].mxu0
    %971 = vmatprep.mubr.f32.mxu0 0.0
    %972 = vmatmul.mubr.f32.gmra.mrb[0].mxu0 %v801
    %v973 = vpop.f32.mrb[0].mxu0
    %v974 = vadd.f32 0.0, %v973
    %v975 = vpop.f32.mrb[0].mxu0
    %976 = vmatprep.mubr.f32.mxu0 0.0
    %977 = vmatmul.mubr.f32.gmra.mrb[0].mxu0 %v803
    %v978 = vpop.f32.mrb[0].mxu0
    %v979 = vadd.f32 0.0, %v978
    %v980 = vpop.f32.mrb[0].mxu0
    %981 = vdwg.mxu0
    %v982 = vmul.f32 %v904, 0.35355338
    %v983 = vmul.f32 %v909, 0.35355338
    %v984 = vmul.f32 %v914, 0.35355338
    %v985 = vmul.f32 %v919, 0.35355338
    %v986 = vmul.f32 %v924, 0.35355338
    %v987 = vmul.f32 %v929, 0.35355338
    %v988 = vmul.f32 %v934, 0.35355338
    %v989 = vmul.f32 %v939, 0.35355338
    %v990 = vmul.f32 %v944, 0.35355338
    %v991 = vmul.f32 %v949, 0.35355338
    %v992 = vmul.f32 %v954, 0.35355338
    %v993 = vmul.f32 %v959, 0.35355338
    %v994 = vmul.f32 %v964, 0.35355338
    %v995 = vmul.f32 %v969, 0.35355338
    %v996 = vmul.f32 %v974, 0.35355338
    %v997 = vmul.f32 %v979, 0.35355338
    %s998 = scalar_lea.vmem [#allocation2], 128
    %v999 = vld [vmem:[%s998] sm:$0xff]
    %v1000 = vld [vmem:[%s998 + $0x8] sm:$0xff]
    %v1001 = vld [vmem:[%s998 + $0x10] sm:$0xff]
    %v1002 = vld [vmem:[%s998 + $0x18] sm:$0xff]
    %v1003 = vld [vmem:[%s998 + $0x20] sm:$0xff]
    %v1004 = vld [vmem:[%s998 + $0x28] sm:$0xff]
    %v1005 = vld [vmem:[%s998 + $0x30] sm:$0xff]
    %v1006 = vld [vmem:[%s998 + $0x38] sm:$0xff]
    %v1007 = vld [vmem:[%s998 + $0x40] sm:$0xff]
    %v1008 = vld [vmem:[%s998 + $0x48] sm:$0xff]
    %v1009 = vld [vmem:[%s998 + $0x50] sm:$0xff]
    %v1010 = vld [vmem:[%s998 + $0x58] sm:$0xff]
    %v1011 = vld [vmem:[%s998 + $0x60] sm:$0xff]
    %v1012 = vld [vmem:[%s998 + $0x68] sm:$0xff]
    %v1013 = vld [vmem:[%s998 + $0x70] sm:$0xff]
    %v1014 = vld [vmem:[%s998 + $0x78] sm:$0xff]
    %v1015 = vadd.f32 %v982, %v999
    %v1016 = vadd.f32 %v983, %v1000
    %v1017 = vadd.f32 %v984, %v1001
    %v1018 = vadd.f32 %v985, %v1002
    %v1019 = vadd.f32 %v986, %v1003
    %v1020 = vadd.f32 %v987, %v1004
    %v1021 = vadd.f32 %v988, %v1005
    %v1022 = vadd.f32 %v989, %v1006
    %v1023 = vadd.f32 %v990, %v1007
    %v1024 = vadd.f32 %v991, %v1008
    %v1025 = vadd.f32 %v992, %v1009
    %v1026 = vadd.f32 %v993, %v1010
    %v1027 = vadd.f32 %v994, %v1011
    %v1028 = vadd.f32 %v995, %v1012
    %v1029 = vadd.f32 %v996, %v1013
    %v1030 = vadd.f32 %v997, %v1014
    %v1031 = vadd.f32 %v1015, %v82
    %v1032 = vadd.f32 %v1016, %v83
    %v1033 = vadd.f32 %v1017, %v84
    %v1034 = vadd.f32 %v1018, %v85
    %v1035 = vadd.f32 %v1019, %v86
    %v1036 = vadd.f32 %v1020, %v87
    %v1037 = vadd.f32 %v1021, %v88
    %v1038 = vadd.f32 %v1022, %v89
    %v1039 = vadd.f32 %v1023, %v90
    %v1040 = vadd.f32 %v1024, %v91
    %v1041 = vadd.f32 %v1025, %v92
    %v1042 = vadd.f32 %v1026, %v93
    %v1043 = vadd.f32 %v1027, %v94
    %v1044 = vadd.f32 %v1028, %v95
    %v1045 = vadd.f32 %v1029, %v96
    %v1046 = vadd.f32 %v1030, %v97
    %1047 = vmax.xlane.f32.xlu0 %v1031
    %v1048 = vpop.xlane.xlu0 %1047
    %1049 = vmax.xlane.f32.xlu0 %v1032
    %v1050 = vpop.xlane.xlu0 %1049
    %1051 = vmax.xlane.f32.xlu0 %v1033
    %v1052 = vpop.xlane.xlu0 %1051
    %1053 = vmax.xlane.f32.xlu0 %v1034
    %v1054 = vpop.xlane.xlu0 %1053
    %1055 = vmax.xlane.f32.xlu0 %v1035
    %v1056 = vpop.xlane.xlu0 %1055
    %1057 = vmax.xlane.f32.xlu0 %v1036
    %v1058 = vpop.xlane.xlu0 %1057
    %1059 = vmax.xlane.f32.xlu0 %v1037
    %v1060 = vpop.xlane.xlu0 %1059
    %1061 = vmax.xlane.f32.xlu0 %v1038
    %v1062 = vpop.xlane.xlu0 %1061
    %1063 = vmax.xlane.f32.xlu0 %v1039
    %v1064 = vpop.xlane.xlu0 %1063
    %1065 = vmax.xlane.f32.xlu0 %v1040
    %v1066 = vpop.xlane.xlu0 %1065
    %1067 = vmax.xlane.f32.xlu0 %v1041
    %v1068 = vpop.xlane.xlu0 %1067
    %1069 = vmax.xlane.f32.xlu0 %v1042
    %v1070 = vpop.xlane.xlu0 %1069
    %1071 = vmax.xlane.f32.xlu0 %v1043
    %v1072 = vpop.xlane.xlu0 %1071
    %1073 = vmax.xlane.f32.xlu0 %v1044
    %v1074 = vpop.xlane.xlu0 %1073
    %1075 = vmax.xlane.f32.xlu0 %v1045
    %v1076 = vpop.xlane.xlu0 %1075
    %1077 = vmax.xlane.f32.xlu0 %v1046
    %v1078 = vpop.xlane.xlu0 %1077
    %v1079 = vsub.f32 %v1031, %v1048
    %v1080 = vsub.f32 %v1032, %v1050
    %v1081 = vsub.f32 %v1033, %v1052
    %v1082 = vsub.f32 %v1034, %v1054
    %v1083 = vsub.f32 %v1035, %v1056
    %v1084 = vsub.f32 %v1036, %v1058
    %v1085 = vsub.f32 %v1037, %v1060
    %v1086 = vsub.f32 %v1038, %v1062
    %v1087 = vsub.f32 %v1039, %v1064
    %v1088 = vsub.f32 %v1040, %v1066
    %v1089 = vsub.f32 %v1041, %v1068
    %v1090 = vsub.f32 %v1042, %v1070
    %v1091 = vsub.f32 %v1043, %v1072
    %v1092 = vsub.f32 %v1044, %v1074
    %v1093 = vsub.f32 %v1045, %v1076
    %v1094 = vsub.f32 %v1046, %v1078
    %v1095 = vmul.f32 %v1079, 1.442695
    %v1096 = vpow.pop %v1095
    %v1097 = vmul.f32 %v1080, 1.442695
    %v1098 = vpow.pop %v1097
    %v1099 = vmul.f32 %v1081, 1.442695
    %v1100 = vpow.pop %v1099
    %v1101 = vmul.f32 %v1082, 1.442695
    %v1102 = vpow.pop %v1101
    %v1103 = vmul.f32 %v1083, 1.442695
    %v1104 = vpow.pop %v1103
    %v1105 = vmul.f32 %v1084, 1.442695
    %v1106 = vpow.pop %v1105
    %v1107 = vmul.f32 %v1085, 1.442695
    %v1108 = vpow.pop %v1107
    %v1109 = vmul.f32 %v1086, 1.442695
    %v1110 = vpow.pop %v1109
    %v1111 = vmul.f32 %v1087, 1.442695
    %v1112 = vpow.pop %v1111
    %v1113 = vmul.f32 %v1088, 1.442695
    %v1114 = vpow.pop %v1113
    %v1115 = vmul.f32 %v1089, 1.442695
    %v1116 = vpow.pop %v1115
    %v1117 = vmul.f32 %v1090, 1.442695
    %v1118 = vpow.pop %v1117
    %v1119 = vmul.f32 %v1091, 1.442695
    %v1120 = vpow.pop %v1119
    %v1121 = vmul.f32 %v1092, 1.442695
    %v1122 = vpow.pop %v1121
    %v1123 = vmul.f32 %v1093, 1.442695
    %v1124 = vpow.pop %v1123
    %v1125 = vmul.f32 %v1094, 1.442695
    %v1126 = vpow.pop %v1125
    %1127 = vadd.xlane.f32.xlu0 %v1096
    %v1128 = vpop.xlane.xlu0 %1127
    %1129 = vadd.xlane.f32.xlu0 %v1098
    %v1130 = vpop.xlane.xlu0 %1129
    %1131 = vadd.xlane.f32.xlu0 %v1100
    %v1132 = vpop.xlane.xlu0 %1131
    %1133 = vadd.xlane.f32.xlu0 %v1102
    %v1134 = vpop.xlane.xlu0 %1133
    %1135 = vadd.xlane.f32.xlu0 %v1104
    %v1136 = vpop.xlane.xlu0 %1135
    %1137 = vadd.xlane.f32.xlu0 %v1106
    %v1138 = vpop.xlane.xlu0 %1137
    %1139 = vadd.xlane.f32.xlu0 %v1108
    %v1140 = vpop.xlane.xlu0 %1139
    %1141 = vadd.xlane.f32.xlu0 %v1110
    %v1142 = vpop.xlane.xlu0 %1141
    %1143 = vadd.xlane.f32.xlu0 %v1112
    %v1144 = vpop.xlane.xlu0 %1143
    %1145 = vadd.xlane.f32.xlu0 %v1114
    %v1146 = vpop.xlane.xlu0 %1145
    %1147 = vadd.xlane.f32.xlu0 %v1116
    %v1148 = vpop.xlane.xlu0 %1147
    %1149 = vadd.xlane.f32.xlu0 %v1118
    %v1150 = vpop.xlane.xlu0 %1149
    %1151 = vadd.xlane.f32.xlu0 %v1120
    %v1152 = vpop.xlane.xlu0 %1151
    %1153 = vadd.xlane.f32.xlu0 %v1122
    %v1154 = vpop.xlane.xlu0 %1153
    %1155 = vadd.xlane.f32.xlu0 %v1124
    %v1156 = vpop.xlane.xlu0 %1155
    %1157 = vadd.xlane.f32.xlu0 %v1126
    %v1158 = vpop.xlane.xlu0 %1157
    %1175 = vrot.lane.b32.xlu0 %v66, 120
    %v1176 = vpop.permute.xlu0 %1175
    %1177 = vrot.lane.b32.xlu0 %v67, 120
    %v1178 = vpop.permute.xlu0 %1177
    %1179 = vrot.lane.b32.xlu0 %v68, 120
    %v1180 = vpop.permute.xlu0 %1179
    %1181 = vrot.lane.b32.xlu0 %v69, 120
    %v1182 = vpop.permute.xlu0 %1181
    %1183 = vrot.lane.b32.xlu0 %v70, 120
    %v1184 = vpop.permute.xlu0 %1183
    %1185 = vrot.lane.b32.xlu0 %v71, 120
    %v1186 = vpop.permute.xlu0 %1185
    %1187 = vrot.lane.b32.xlu0 %v72, 120
    %v1188 = vpop.permute.xlu0 %1187
    %1189 = vrot.lane.b32.xlu0 %v73, 120
    %v1190 = vpop.permute.xlu0 %1189
    %1191 = vrot.lane.b32.xlu0 %v74, 120
    %v1192 = vpop.permute.xlu0 %1191
    %1193 = vrot.lane.b32.xlu0 %v75, 120
    %v1194 = vpop.permute.xlu0 %1193
    %1195 = vrot.lane.b32.xlu0 %v76, 120
    %v1196 = vpop.permute.xlu0 %1195
    %1197 = vrot.lane.b32.xlu0 %v77, 120
    %v1198 = vpop.permute.xlu0 %1197
    %1199 = vrot.lane.b32.xlu0 %v78, 120
    %v1200 = vpop.permute.xlu0 %1199
    %1201 = vrot.lane.b32.xlu0 %v79, 120
    %v1202 = vpop.permute.xlu0 %1201
    %1203 = vrot.lane.b32.xlu0 %v80, 120
    %v1204 = vpop.permute.xlu0 %1203
    %1205 = vrot.lane.b32.xlu0 %v81, 120
    %v1206 = vpop.permute.xlu0 %1205
    %1223 = vmatprep.subr.mxu0 0.0
    %1224 = vmatpush1.msra.mxu0 %v1176
    %1225 = vmatprep.subr.mxu0 0.0
    %1226 = vmatpush1.msra.mxu0 %v1178
    %1227 = vmatprep.subr.mxu0 0.0
    %1228 = vmatpush1.msra.mxu0 %v1180
    %1229 = vmatprep.subr.mxu0 0.0
    %1230 = vmatpush1.msra.mxu0 %v1182
    %1231 = vmatprep.subr.mxu0 0.0
    %1232 = vmatpush1.msra.mxu0 %v1184
    %1233 = vmatprep.subr.mxu0 0.0
    %1234 = vmatpush1.msra.mxu0 %v1186
    %1235 = vmatprep.subr.mxu0 0.0
    %1236 = vmatpush1.msra.mxu0 %v1188
    %1237 = vmatprep.subr.mxu0 0.0
    %1238 = vmatpush1.msra.mxu0 %v1190
    %1239 = vmatprep.subr.mxu0 0.0
    %1240 = vmatpush1.msra.mxu0 %v1192
    %1241 = vmatprep.subr.mxu0 0.0
    %1242 = vmatpush1.msra.mxu0 %v1194
    %1243 = vmatprep.subr.mxu0 0.0
    %1244 = vmatpush1.msra.mxu0 %v1196
    %1245 = vmatprep.subr.mxu0 0.0
    %1246 = vmatpush1.msra.mxu0 %v1198
    %1247 = vmatprep.subr.mxu0 0.0
    %1248 = vmatpush1.msra.mxu0 %v1200
    %1249 = vmatprep.subr.mxu0 0.0
    %1250 = vmatpush1.msra.mxu0 %v1202
    %1251 = vmatprep.subr.mxu0 0.0
    %1252 = vmatpush1.msra.mxu0 %v1204
    %1253 = vmatprep.subr.mxu0 0.0
    %1254 = vmatpush1.msra.mxu0 %v1206
    %1255 = vmatprep.subr.mxu0 0.0
    %1256 = vmatpush1.msra.mxu0 0.0
    %1257 = vmatprep.subr.mxu0 0.0
    %1258 = vmatpush1.msra.mxu0 0.0
    %1259 = vmatprep.subr.mxu0 0.0
    %1260 = vmatpush1.msra.mxu0 0.0
    %1261 = vmatprep.subr.mxu0 0.0
    %1262 = vmatpush1.msra.mxu0 0.0
    %1263 = vmatprep.subr.mxu0 0.0
    %1264 = vmatpush1.msra.mxu0 0.0
    %1265 = vmatprep.subr.mxu0 0.0
    %1266 = vmatpush1.msra.mxu0 0.0
    %1267 = vmatprep.subr.mxu0 0.0
    %1268 = vmatpush1.msra.mxu0 0.0
    %1269 = vmatprep.subr.mxu0 0.0
    %1270 = vmatpush1.msra.mxu0 0.0
    %1271 = vmatprep.subr.mxu0 0.0
    %1272 = vmatpush1.msra.mxu0 0.0
    %1273 = vmatprep.subr.mxu0 0.0
    %1274 = vmatpush1.msra.mxu0 0.0
    %1275 = vmatprep.subr.mxu0 0.0
    %1276 = vmatpush1.msra.mxu0 0.0
    %1277 = vmatprep.subr.mxu0 0.0
    %1278 = vmatpush1.msra.mxu0 0.0
    %1279 = vmatprep.subr.mxu0 0.0
    %1280 = vmatpush1.msra.mxu0 0.0
    %1281 = vmatprep.subr.mxu0 0.0
    %1282 = vmatpush1.msra.mxu0 0.0
    %1283 = vmatprep.subr.mxu0 0.0
    %1284 = vmatpush1.msra.mxu0 0.0
    %1285 = vmatprep.subr.mxu0 0.0
    %1286 = vmatpush1.msra.mxu0 0.0
    %1287 = vmatprep.mubr.f32.mxu0 0.0
    %1288 = vmatmul.mubr.f32.gmra.mrb[0].mxu0 %v1096
    %v1289 = vpop.f32.mrb[0].mxu0
    %v1290 = vadd.f32 0.0, %v1289
    %v1291 = vpop.f32.mrb[0].mxu0
    %1292 = vmatprep.mubr.f32.mxu0 0.0
    %1293 = vmatmul.mubr.f32.gmra.mrb[0].mxu0 %v1098
    %v1294 = vpop.f32.mrb[0].mxu0
    %v1295 = vadd.f32 0.0, %v1294
    %v1296 = vpop.f32.mrb[0].mxu0
    %1297 = vmatprep.mubr.f32.mxu0 0.0
    %1298 = vmatmul.mubr.f32.gmra.mrb[0].mxu0 %v1100
    %v1299 = vpop.f32.mrb[0].mxu0
    %v1300 = vadd.f32 0.0, %v1299
    %v1301 = vpop.f32.mrb[0].mxu0
    %1302 = vmatprep.mubr.f32.mxu0 0.0
    %1303 = vmatmul.mubr.f32.gmra.mrb[0].mxu0 %v1102
    %v1304 = vpop.f32.mrb[0].mxu0
    %v1305 = vadd.f32 0.0, %v1304
    %v1306 = vpop.f32.mrb[0].mxu0
    %1307 = vmatprep.mubr.f32.mxu0 0.0
    %1308 = vmatmul.mubr.f32.gmra.mrb[0].mxu0 %v1104
    %v1309 = vpop.f32.mrb[0].mxu0
    %v1310 = vadd.f32 0.0, %v1309
    %v1311 = vpop.f32.mrb[0].mxu0
    %1312 = vmatprep.mubr.f32.mxu0 0.0
    %1313 = vmatmul.mubr.f32.gmra.mrb[0].mxu0 %v1106
    %v1314 = vpop.f32.mrb[0].mxu0
    %v1315 = vadd.f32 0.0, %v1314
    %v1316 = vpop.f32.mrb[0].mxu0
    %1317 = vmatprep.mubr.f32.mxu0 0.0
    %1318 = vmatmul.mubr.f32.gmra.mrb[0].mxu0 %v1108
    %v1319 = vpop.f32.mrb[0].mxu0
    %v1320 = vadd.f32 0.0, %v1319
    %v1321 = vpop.f32.mrb[0].mxu0
    %1322 = vmatprep.mubr.f32.mxu0 0.0
    %1323 = vmatmul.mubr.f32.gmra.mrb[0].mxu0 %v1110
    %v1324 = vpop.f32.mrb[0].mxu0
    %v1325 = vadd.f32 0.0, %v1324
    %v1326 = vpop.f32.mrb[0].mxu0
    %1327 = vmatprep.mubr.f32.mxu0 0.0
    %1328 = vmatmul.mubr.f32.gmra.mrb[0].mxu0 %v1112
    %v1329 = vpop.f32.mrb[0].mxu0
    %v1330 = vadd.f32 0.0, %v1329
    %v1331 = vpop.f32.mrb[0].mxu0
    %1332 = vmatprep.mubr.f32.mxu0 0.0
    %1333 = vmatmul.mubr.f32.gmra.mrb[0].mxu0 %v1114
    %v1334 = vpop.f32.mrb[0].mxu0
    %v1335 = vadd.f32 0.0, %v1334
    %v1336 = vpop.f32.mrb[0].mxu0
    %1337 = vmatprep.mubr.f32.mxu0 0.0
    %1338 = vmatmul.mubr.f32.gmra.mrb[0].mxu0 %v1116
    %v1339 = vpop.f32.mrb[0].mxu0
    %v1340 = vadd.f32 0.0, %v1339
    %v1341 = vpop.f32.mrb[0].mxu0
    %1342 = vmatprep.mubr.f32.mxu0 0.0
    %1343 = vmatmul.mubr.f32.gmra.mrb[0].mxu0 %v1118
    %v1344 = vpop.f32.mrb[0].mxu0
    %v1345 = vadd.f32 0.0, %v1344
    %v1346 = vpop.f32.mrb[0].mxu0
    %1347 = vmatprep.mubr.f32.mxu0 0.0
    %1348 = vmatmul.mubr.f32.gmra.mrb[0].mxu0 %v1120
    %v1349 = vpop.f32.mrb[0].mxu0
    %v1350 = vadd.f32 0.0, %v1349
    %v1351 = vpop.f32.mrb[0].mxu0
    %1352 = vmatprep.mubr.f32.mxu0 0.0
    %1353 = vmatmul.mubr.f32.gmra.mrb[0].mxu0 %v1122
    %v1354 = vpop.f32.mrb[0].mxu0
    %v1355 = vadd.f32 0.0, %v1354
    %v1356 = vpop.f32.mrb[0].mxu0
    %1357 = vmatprep.mubr.f32.mxu0 0.0
    %1358 = vmatmul.mubr.f32.gmra.mrb[0].mxu0 %v1124
    %v1359 = vpop.f32.mrb[0].mxu0
    %v1360 = vadd.f32 0.0, %v1359
    %v1361 = vpop.f32.mrb[0].mxu0
    %1362 = vmatprep.mubr.f32.mxu0 0.0
    %1363 = vmatmul.mubr.f32.gmra.mrb[0].mxu0 %v1126
    %v1364 = vpop.f32.mrb[0].mxu0
    %v1365 = vadd.f32 0.0, %v1364
    %v1366 = vpop.f32.mrb[0].mxu0
    %1367 = vdwg.mxu0
    %v1368 = vrcp.pop %v1128
    %v1369 = vmul.f32 1.0, %v1368
    %v1370 = vrcp.pop %v1130
    %v1371 = vmul.f32 1.0, %v1370
    %v1372 = vrcp.pop %v1132
    %v1373 = vmul.f32 1.0, %v1372
    %v1374 = vrcp.pop %v1134
    %v1375 = vmul.f32 1.0, %v1374
    %v1376 = vrcp.pop %v1136
    %v1377 = vmul.f32 1.0, %v1376
    %v1378 = vrcp.pop %v1138
    %v1379 = vmul.f32 1.0, %v1378
    %v1380 = vrcp.pop %v1140
    %v1381 = vmul.f32 1.0, %v1380
    %v1382 = vrcp.pop %v1142
    %v1383 = vmul.f32 1.0, %v1382
    %v1384 = vrcp.pop %v1144
    %v1385 = vmul.f32 1.0, %v1384
    %v1386 = vrcp.pop %v1146
    %v1387 = vmul.f32 1.0, %v1386
    %v1388 = vrcp.pop %v1148
    %v1389 = vmul.f32 1.0, %v1388
    %v1390 = vrcp.pop %v1150
    %v1391 = vmul.f32 1.0, %v1390
    %v1392 = vrcp.pop %v1152
    %v1393 = vmul.f32 1.0, %v1392
    %v1394 = vrcp.pop %v1154
    %v1395 = vmul.f32 1.0, %v1394
    %v1396 = vrcp.pop %v1156
    %v1397 = vmul.f32 1.0, %v1396
    %v1398 = vrcp.pop %v1158
    %v1399 = vmul.f32 1.0, %v1398
    %v1400 = vmul.f32 %v1290, %v1369
    %v1401 = vmul.f32 %v1295, %v1371
    %v1402 = vmul.f32 %v1300, %v1373
    %v1403 = vmul.f32 %v1305, %v1375
    %v1404 = vmul.f32 %v1310, %v1377
    %v1405 = vmul.f32 %v1315, %v1379
    %v1406 = vmul.f32 %v1320, %v1381
    %v1407 = vmul.f32 %v1325, %v1383
    %v1408 = vmul.f32 %v1330, %v1385
    %v1409 = vmul.f32 %v1335, %v1387
    %v1410 = vmul.f32 %v1340, %v1389
    %v1411 = vmul.f32 %v1345, %v1391
    %v1412 = vmul.f32 %v1350, %v1393
    %v1413 = vmul.f32 %v1355, %v1395
    %v1414 = vmul.f32 %v1360, %v1397
    %v1415 = vmul.f32 %v1365, %v1399
    %1416 = vrot.lane.b32.xlu0 %v34, 112
    %v1417 = vpop.permute.xlu0 %1416
    %1418 = vrot.lane.b32.xlu0 %v35, 112
    %v1419 = vpop.permute.xlu0 %1418
    %1420 = vrot.lane.b32.xlu0 %v36, 112
    %v1421 = vpop.permute.xlu0 %1420
    %1422 = vrot.lane.b32.xlu0 %v37, 112
    %v1423 = vpop.permute.xlu0 %1422
    %1424 = vrot.lane.b32.xlu0 %v38, 112
    %v1425 = vpop.permute.xlu0 %1424
    %1426 = vrot.lane.b32.xlu0 %v39, 112
    %v1427 = vpop.permute.xlu0 %1426
    %1428 = vrot.lane.b32.xlu0 %v40, 112
    %v1429 = vpop.permute.xlu0 %1428
    %1430 = vrot.lane.b32.xlu0 %v41, 112
    %v1431 = vpop.permute.xlu0 %1430
    %1432 = vrot.lane.b32.xlu0 %v42, 112
    %v1433 = vpop.permute.xlu0 %1432
    %1434 = vrot.lane.b32.xlu0 %v43, 112
    %v1435 = vpop.permute.xlu0 %1434
    %1436 = vrot.lane.b32.xlu0 %v44, 112
    %v1437 = vpop.permute.xlu0 %1436
    %1438 = vrot.lane.b32.xlu0 %v45, 112
    %v1439 = vpop.permute.xlu0 %1438
    %1440 = vrot.lane.b32.xlu0 %v46, 112
    %v1441 = vpop.permute.xlu0 %1440
    %1442 = vrot.lane.b32.xlu0 %v47, 112
    %v1443 = vpop.permute.xlu0 %1442
    %1444 = vrot.lane.b32.xlu0 %v48, 112
    %v1445 = vpop.permute.xlu0 %1444
    %1446 = vrot.lane.b32.xlu0 %v49, 112
    %v1447 = vpop.permute.xlu0 %1446
    %1448 = vrot.lane.b32.xlu0 %v50, 112
    %v1449 = vpop.permute.xlu0 %1448
    %1450 = vrot.lane.b32.xlu0 %v51, 112
    %v1451 = vpop.permute.xlu0 %1450
    %1452 = vrot.lane.b32.xlu0 %v52, 112
    %v1453 = vpop.permute.xlu0 %1452
    %1454 = vrot.lane.b32.xlu0 %v53, 112
    %v1455 = vpop.permute.xlu0 %1454
    %1456 = vrot.lane.b32.xlu0 %v54, 112
    %v1457 = vpop.permute.xlu0 %1456
    %1458 = vrot.lane.b32.xlu0 %v55, 112
    %v1459 = vpop.permute.xlu0 %1458
    %1460 = vrot.lane.b32.xlu0 %v56, 112
    %v1461 = vpop.permute.xlu0 %1460
    %1462 = vrot.lane.b32.xlu0 %v57, 112
    %v1463 = vpop.permute.xlu0 %1462
    %1464 = vrot.lane.b32.xlu0 %v58, 112
    %v1465 = vpop.permute.xlu0 %1464
    %1466 = vrot.lane.b32.xlu0 %v59, 112
    %v1467 = vpop.permute.xlu0 %1466
    %1468 = vrot.lane.b32.xlu0 %v60, 112
    %v1469 = vpop.permute.xlu0 %1468
    %1470 = vrot.lane.b32.xlu0 %v61, 112
    %v1471 = vpop.permute.xlu0 %1470
    %1472 = vrot.lane.b32.xlu0 %v62, 112
    %v1473 = vpop.permute.xlu0 %1472
    %1474 = vrot.lane.b32.xlu0 %v63, 112
    %v1475 = vpop.permute.xlu0 %1474
    %1476 = vrot.lane.b32.xlu0 %v64, 112
    %v1477 = vpop.permute.xlu0 %1476
    %1478 = vrot.lane.b32.xlu0 %v65, 112
    %v1479 = vpop.permute.xlu0 %1478
    %v1480 = vsel %vm98, %v1417, 0
    %v1482 = vsel %vm98, %v1419, 0
    %v1484 = vsel %vm98, %v1421, 0
    %v1486 = vsel %vm98, %v1423, 0
    %v1488 = vsel %vm98, %v1425, 0
    %v1490 = vsel %vm98, %v1427, 0
    %v1492 = vsel %vm98, %v1429, 0
    %v1494 = vsel %vm98, %v1431, 0
    %v1496 = vsel %vm98, %v1433, 0
    %v1498 = vsel %vm98, %v1435, 0
    %v1500 = vsel %vm98, %v1437, 0
    %v1502 = vsel %vm98, %v1439, 0
    %v1504 = vsel %vm98, %v1441, 0
    %v1506 = vsel %vm98, %v1443, 0
    %v1508 = vsel %vm98, %v1445, 0
    %v1510 = vsel %vm98, %v1447, 0
    %v1512 = vsel %vm98, %v1449, 0
    %v1514 = vsel %vm98, %v1451, 0
    %v1516 = vsel %vm98, %v1453, 0
    %v1518 = vsel %vm98, %v1455, 0
    %v1520 = vsel %vm98, %v1457, 0
    %v1522 = vsel %vm98, %v1459, 0
    %v1524 = vsel %vm98, %v1461, 0
    %v1526 = vsel %vm98, %v1463, 0
    %v1528 = vsel %vm98, %v1465, 0
    %v1530 = vsel %vm98, %v1467, 0
    %v1532 = vsel %vm98, %v1469, 0
    %v1534 = vsel %vm98, %v1471, 0
    %v1536 = vsel %vm98, %v1473, 0
    %v1538 = vsel %vm98, %v1475, 0
    %v1540 = vsel %vm98, %v1477, 0
    %v1542 = vsel %vm98, %v1479, 0
    %1544 = vmatprep.subr.mxu0 0.0
    %1545 = vmatpush1.xpose.msra.mxu0 %v1512
    %1546 = vmatprep.subr.mxu0 0.0
    %1547 = vmatpush1.xpose.msra.mxu0 %v1514
    %1548 = vmatprep.subr.mxu0 0.0
    %1549 = vmatpush1.xpose.msra.mxu0 %v1516
    %1550 = vmatprep.subr.mxu0 0.0
    %1551 = vmatpush1.xpose.msra.mxu0 %v1518
    %1552 = vmatprep.subr.mxu0 0.0
    %1553 = vmatpush1.xpose.msra.mxu0 %v1520
    %1554 = vmatprep.subr.mxu0 0.0
    %1555 = vmatpush1.xpose.msra.mxu0 %v1522
    %1556 = vmatprep.subr.mxu0 0.0
    %1557 = vmatpush1.xpose.msra.mxu0 %v1524
    %1558 = vmatprep.subr.mxu0 0.0
    %1559 = vmatpush1.xpose.msra.mxu0 %v1526
    %1560 = vmatprep.subr.mxu0 0.0
    %1561 = vmatpush1.xpose.msra.mxu0 %v1528
    %1562 = vmatprep.subr.mxu0 0.0
    %1563 = vmatpush1.xpose.msra.mxu0 %v1530
    %1564 = vmatprep.subr.mxu0 0.0
    %1565 = vmatpush1.xpose.msra.mxu0 %v1532
    %1566 = vmatprep.subr.mxu0 0.0
    %1567 = vmatpush1.xpose.msra.mxu0 %v1534
    %1568 = vmatprep.subr.mxu0 0.0
    %1569 = vmatpush1.xpose.msra.mxu0 %v1536
    %1570 = vmatprep.subr.mxu0 0.0
    %1571 = vmatpush1.xpose.msra.mxu0 %v1538
    %1572 = vmatprep.subr.mxu0 0.0
    %1573 = vmatpush1.xpose.msra.mxu0 %v1540
    %1574 = vmatprep.subr.mxu0 0.0
    %1575 = vmatpush1.xpose.msra.mxu0 %v1542
    %1576 = vmatprep.subr.mxu0 0.0
    %1577 = vmatpush1.xpose.msra.mxu0 0.0
    %1578 = vmatprep.subr.mxu0 0.0
    %1579 = vmatpush1.xpose.msra.mxu0 0.0
    %1580 = vmatprep.subr.mxu0 0.0
    %1581 = vmatpush1.xpose.msra.mxu0 0.0
    %1582 = vmatprep.subr.mxu0 0.0
    %1583 = vmatpush1.xpose.msra.mxu0 0.0
    %1584 = vmatprep.subr.mxu0 0.0
    %1585 = vmatpush1.xpose.msra.mxu0 0.0
    %1586 = vmatprep.subr.mxu0 0.0
    %1587 = vmatpush1.xpose.msra.mxu0 0.0
    %1588 = vmatprep.subr.mxu0 0.0
    %1589 = vmatpush1.xpose.msra.mxu0 0.0
    %1590 = vmatprep.subr.mxu0 0.0
    %1591 = vmatpush1.xpose.msra.mxu0 0.0
    %1592 = vmatprep.subr.mxu0 0.0
    %1593 = vmatpush1.xpose.msra.mxu0 0.0
    %1594 = vmatprep.subr.mxu0 0.0
    %1595 = vmatpush1.xpose.msra.mxu0 0.0
    %1596 = vmatprep.subr.mxu0 0.0
    %1597 = vmatpush1.xpose.msra.mxu0 0.0
    %1598 = vmatprep.subr.mxu0 0.0
    %1599 = vmatpush1.xpose.msra.mxu0 0.0
    %1600 = vmatprep.subr.mxu0 0.0
    %1601 = vmatpush1.xpose.msra.mxu0 0.0
    %1602 = vmatprep.subr.mxu0 0.0
    %1603 = vmatpush1.xpose.msra.mxu0 0.0
    %1604 = vmatprep.subr.mxu0 0.0
    %1605 = vmatpush1.xpose.msra.mxu0 0.0
    %1606 = vmatprep.subr.mxu0 0.0
    %1607 = vmatpush1.xpose.msra.mxu0 0.0
    %1608 = vmatprep.mubr.f32.mxu0 0.0
    %1609 = vmatmul.mubr.f32.gmra.mrb[0].mxu0 %v1480
    %v1610 = vpop.f32.mrb[0].mxu0
    %v1611 = vadd.f32 0.0, %v1610
    %v1612 = vpop.f32.mrb[0].mxu0
    %1613 = vmatprep.mubr.f32.mxu0 0.0
    %1614 = vmatmul.mubr.f32.gmra.mrb[0].mxu0 %v1482
    %v1615 = vpop.f32.mrb[0].mxu0
    %v1616 = vadd.f32 0.0, %v1615
    %v1617 = vpop.f32.mrb[0].mxu0
    %1618 = vmatprep.mubr.f32.mxu0 0.0
    %1619 = vmatmul.mubr.f32.gmra.mrb[0].mxu0 %v1484
    %v1620 = vpop.f32.mrb[0].mxu0
    %v1621 = vadd.f32 0.0, %v1620
    %v1622 = vpop.f32.mrb[0].mxu0
    %1623 = vmatprep.mubr.f32.mxu0 0.0
    %1624 = vmatmul.mubr.f32.gmra.mrb[0].mxu0 %v1486
    %v1625 = vpop.f32.mrb[0].mxu0
    %v1626 = vadd.f32 0.0, %v1625
    %v1627 = vpop.f32.mrb[0].mxu0
    %1628 = vmatprep.mubr.f32.mxu0 0.0
    %1629 = vmatmul.mubr.f32.gmra.mrb[0].mxu0 %v1488
    %v1630 = vpop.f32.mrb[0].mxu0
    %v1631 = vadd.f32 0.0, %v1630
    %v1632 = vpop.f32.mrb[0].mxu0
    %1633 = vmatprep.mubr.f32.mxu0 0.0
    %1634 = vmatmul.mubr.f32.gmra.mrb[0].mxu0 %v1490
    %v1635 = vpop.f32.mrb[0].mxu0
    %v1636 = vadd.f32 0.0, %v1635
    %v1637 = vpop.f32.mrb[0].mxu0
    %1638 = vmatprep.mubr.f32.mxu0 0.0
    %1639 = vmatmul.mubr.f32.gmra.mrb[0].mxu0 %v1492
    %v1640 = vpop.f32.mrb[0].mxu0
    %v1641 = vadd.f32 0.0, %v1640
    %v1642 = vpop.f32.mrb[0].mxu0
    %1643 = vmatprep.mubr.f32.mxu0 0.0
    %1644 = vmatmul.mubr.f32.gmra.mrb[0].mxu0 %v1494
    %v1645 = vpop.f32.mrb[0].mxu0
    %v1646 = vadd.f32 0.0, %v1645
    %v1647 = vpop.f32.mrb[0].mxu0
    %1648 = vmatprep.mubr.f32.mxu0 0.0
    %1649 = vmatmul.mubr.f32.gmra.mrb[0].mxu0 %v1496
    %v1650 = vpop.f32.mrb[0].mxu0
    %v1651 = vadd.f32 0.0, %v1650
    %v1652 = vpop.f32.mrb[0].mxu0
    %1653 = vmatprep.mubr.f32.mxu0 0.0
    %1654 = vmatmul.mubr.f32.gmra.mrb[0].mxu0 %v1498
    %v1655 = vpop.f32.mrb[0].mxu0
    %v1656 = vadd.f32 0.0, %v1655
    %v1657 = vpop.f32.mrb[0].mxu0
    %1658 = vmatprep.mubr.f32.mxu0 0.0
    %1659 = vmatmul.mubr.f32.gmra.mrb[0].mxu0 %v1500
    %v1660 = vpop.f32.mrb[0].mxu0
    %v1661 = vadd.f32 0.0, %v1660
    %v1662 = vpop.f32.mrb[0].mxu0
    %1663 = vmatprep.mubr.f32.mxu0 0.0
    %1664 = vmatmul.mubr.f32.gmra.mrb[0].mxu0 %v1502
    %v1665 = vpop.f32.mrb[0].mxu0
    %v1666 = vadd.f32 0.0, %v1665
    %v1667 = vpop.f32.mrb[0].mxu0
    %1668 = vmatprep.mubr.f32.mxu0 0.0
    %1669 = vmatmul.mubr.f32.gmra.mrb[0].mxu0 %v1504
    %v1670 = vpop.f32.mrb[0].mxu0
    %v1671 = vadd.f32 0.0, %v1670
    %v1672 = vpop.f32.mrb[0].mxu0
    %1673 = vmatprep.mubr.f32.mxu0 0.0
    %1674 = vmatmul.mubr.f32.gmra.mrb[0].mxu0 %v1506
    %v1675 = vpop.f32.mrb[0].mxu0
    %v1676 = vadd.f32 0.0, %v1675
    %v1677 = vpop.f32.mrb[0].mxu0
    %1678 = vmatprep.mubr.f32.mxu0 0.0
    %1679 = vmatmul.mubr.f32.gmra.mrb[0].mxu0 %v1508
    %v1680 = vpop.f32.mrb[0].mxu0
    %v1681 = vadd.f32 0.0, %v1680
    %v1682 = vpop.f32.mrb[0].mxu0
    %1683 = vmatprep.mubr.f32.mxu0 0.0
    %1684 = vmatmul.mubr.f32.gmra.mrb[0].mxu0 %v1510
    %v1685 = vpop.f32.mrb[0].mxu0
    %v1686 = vadd.f32 0.0, %v1685
    %v1687 = vpop.f32.mrb[0].mxu0
    %1688 = vdwg.mxu0
    %v1689 = vmul.f32 %v1611, 0.35355338
    %v1690 = vmul.f32 %v1616, 0.35355338
    %v1691 = vmul.f32 %v1621, 0.35355338
    %v1692 = vmul.f32 %v1626, 0.35355338
    %v1693 = vmul.f32 %v1631, 0.35355338
    %v1694 = vmul.f32 %v1636, 0.35355338
    %v1695 = vmul.f32 %v1641, 0.35355338
    %v1696 = vmul.f32 %v1646, 0.35355338
    %v1697 = vmul.f32 %v1651, 0.35355338
    %v1698 = vmul.f32 %v1656, 0.35355338
    %v1699 = vmul.f32 %v1661, 0.35355338
    %v1700 = vmul.f32 %v1666, 0.35355338
    %v1701 = vmul.f32 %v1671, 0.35355338
    %v1702 = vmul.f32 %v1676, 0.35355338
    %v1703 = vmul.f32 %v1681, 0.35355338
    %v1704 = vmul.f32 %v1686, 0.35355338
    %s1705 = scalar_lea.vmem [#allocation2], 256
    %v1706 = vld [vmem:[%s1705] sm:$0xff]
    %v1707 = vld [vmem:[%s1705 + $0x8] sm:$0xff]
    %v1708 = vld [vmem:[%s1705 + $0x10] sm:$0xff]
    %v1709 = vld [vmem:[%s1705 + $0x18] sm:$0xff]
    %v1710 = vld [vmem:[%s1705 + $0x20] sm:$0xff]
    %v1711 = vld [vmem:[%s1705 + $0x28] sm:$0xff]
    %v1712 = vld [vmem:[%s1705 + $0x30] sm:$0xff]
    %v1713 = vld [vmem:[%s1705 + $0x38] sm:$0xff]
    %v1714 = vld [vmem:[%s1705 + $0x40] sm:$0xff]
    %v1715 = vld [vmem:[%s1705 + $0x48] sm:$0xff]
    %v1716 = vld [vmem:[%s1705 + $0x50] sm:$0xff]
    %v1717 = vld [vmem:[%s1705 + $0x58] sm:$0xff]
    %v1718 = vld [vmem:[%s1705 + $0x60] sm:$0xff]
    %v1719 = vld [vmem:[%s1705 + $0x68] sm:$0xff]
    %v1720 = vld [vmem:[%s1705 + $0x70] sm:$0xff]
    %v1721 = vld [vmem:[%s1705 + $0x78] sm:$0xff]
    %v1722 = vadd.f32 %v1689, %v1706
    %v1723 = vadd.f32 %v1690, %v1707
    %v1724 = vadd.f32 %v1691, %v1708
    %v1725 = vadd.f32 %v1692, %v1709
    %v1726 = vadd.f32 %v1693, %v1710
    %v1727 = vadd.f32 %v1694, %v1711
    %v1728 = vadd.f32 %v1695, %v1712
    %v1729 = vadd.f32 %v1696, %v1713
    %v1730 = vadd.f32 %v1697, %v1714
    %v1731 = vadd.f32 %v1698, %v1715
    %v1732 = vadd.f32 %v1699, %v1716
    %v1733 = vadd.f32 %v1700, %v1717
    %v1734 = vadd.f32 %v1701, %v1718
    %v1735 = vadd.f32 %v1702, %v1719
    %v1736 = vadd.f32 %v1703, %v1720
    %v1737 = vadd.f32 %v1704, %v1721
    %v1738 = vadd.f32 %v1722, %v82
    %v1739 = vadd.f32 %v1723, %v83
    %v1740 = vadd.f32 %v1724, %v84
    %v1741 = vadd.f32 %v1725, %v85
    %v1742 = vadd.f32 %v1726, %v86
    %v1743 = vadd.f32 %v1727, %v87
    %v1744 = vadd.f32 %v1728, %v88
    %v1745 = vadd.f32 %v1729, %v89
    %v1746 = vadd.f32 %v1730, %v90
    %v1747 = vadd.f32 %v1731, %v91
    %v1748 = vadd.f32 %v1732, %v92
    %v1749 = vadd.f32 %v1733, %v93
    %v1750 = vadd.f32 %v1734, %v94
    %v1751 = vadd.f32 %v1735, %v95
    %v1752 = vadd.f32 %v1736, %v96
    %v1753 = vadd.f32 %v1737, %v97
    %1754 = vmax.xlane.f32.xlu0 %v1738
    %v1755 = vpop.xlane.xlu0 %1754
    %1756 = vmax.xlane.f32.xlu0 %v1739
    %v1757 = vpop.xlane.xlu0 %1756
    %1758 = vmax.xlane.f32.xlu0 %v1740
    %v1759 = vpop.xlane.xlu0 %1758
    %1760 = vmax.xlane.f32.xlu0 %v1741
    %v1761 = vpop.xlane.xlu0 %1760
    %1762 = vmax.xlane.f32.xlu0 %v1742
    %v1763 = vpop.xlane.xlu0 %1762
    %1764 = vmax.xlane.f32.xlu0 %v1743
    %v1765 = vpop.xlane.xlu0 %1764
    %1766 = vmax.xlane.f32.xlu0 %v1744
    %v1767 = vpop.xlane.xlu0 %1766
    %1768 = vmax.xlane.f32.xlu0 %v1745
    %v1769 = vpop.xlane.xlu0 %1768
    %1770 = vmax.xlane.f32.xlu0 %v1746
    %v1771 = vpop.xlane.xlu0 %1770
    %1772 = vmax.xlane.f32.xlu0 %v1747
    %v1773 = vpop.xlane.xlu0 %1772
    %1774 = vmax.xlane.f32.xlu0 %v1748
    %v1775 = vpop.xlane.xlu0 %1774
    %1776 = vmax.xlane.f32.xlu0 %v1749
    %v1777 = vpop.xlane.xlu0 %1776
    %1778 = vmax.xlane.f32.xlu0 %v1750
    %v1779 = vpop.xlane.xlu0 %1778
    %1780 = vmax.xlane.f32.xlu0 %v1751
    %v1781 = vpop.xlane.xlu0 %1780
    %1782 = vmax.xlane.f32.xlu0 %v1752
    %v1783 = vpop.xlane.xlu0 %1782
    %1784 = vmax.xlane.f32.xlu0 %v1753
    %v1785 = vpop.xlane.xlu0 %1784
    %v1786 = vsub.f32 %v1738, %v1755
    %v1787 = vsub.f32 %v1739, %v1757
    %v1788 = vsub.f32 %v1740, %v1759
    %v1789 = vsub.f32 %v1741, %v1761
    %v1790 = vsub.f32 %v1742, %v1763
    %v1791 = vsub.f32 %v1743, %v1765
    %v1792 = vsub.f32 %v1744, %v1767
    %v1793 = vsub.f32 %v1745, %v1769
    %v1794 = vsub.f32 %v1746, %v1771
    %v1795 = vsub.f32 %v1747, %v1773
    %v1796 = vsub.f32 %v1748, %v1775
    %v1797 = vsub.f32 %v1749, %v1777
    %v1798 = vsub.f32 %v1750, %v1779
    %v1799 = vsub.f32 %v1751, %v1781
    %v1800 = vsub.f32 %v1752, %v1783
    %v1801 = vsub.f32 %v1753, %v1785
    %v1802 = vmul.f32 %v1786, 1.442695
    %v1803 = vpow.pop %v1802
    %v1804 = vmul.f32 %v1787, 1.442695
    %v1805 = vpow.pop %v1804
    %v1806 = vmul.f32 %v1788, 1.442695
    %v1807 = vpow.pop %v1806
    %v1808 = vmul.f32 %v1789, 1.442695
    %v1809 = vpow.pop %v1808
    %v1810 = vmul.f32 %v1790, 1.442695
    %v1811 = vpow.pop %v1810
    %v1812 = vmul.f32 %v1791, 1.442695
    %v1813 = vpow.pop %v1812
    %v1814 = vmul.f32 %v1792, 1.442695
    %v1815 = vpow.pop %v1814
    %v1816 = vmul.f32 %v1793, 1.442695
    %v1817 = vpow.pop %v1816
    %v1818 = vmul.f32 %v1794, 1.442695
    %v1819 = vpow.pop %v1818
    %v1820 = vmul.f32 %v1795, 1.442695
    %v1821 = vpow.pop %v1820
    %v1822 = vmul.f32 %v1796, 1.442695
    %v1823 = vpow.pop %v1822
    %v1824 = vmul.f32 %v1797, 1.442695
    %v1825 = vpow.pop %v1824
    %v1826 = vmul.f32 %v1798, 1.442695
    %v1827 = vpow.pop %v1826
    %v1828 = vmul.f32 %v1799, 1.442695
    %v1829 = vpow.pop %v1828
    %v1830 = vmul.f32 %v1800, 1.442695
    %v1831 = vpow.pop %v1830
    %v1832 = vmul.f32 %v1801, 1.442695
    %v1833 = vpow.pop %v1832
    %1834 = vadd.xlane.f32.xlu0 %v1803
    %v1835 = vpop.xlane.xlu0 %1834
    %1836 = vadd.xlane.f32.xlu0 %v1805
    %v1837 = vpop.xlane.xlu0 %1836
    %1838 = vadd.xlane.f32.xlu0 %v1807
    %v1839 = vpop.xlane.xlu0 %1838
    %1840 = vadd.xlane.f32.xlu0 %v1809
    %v1841 = vpop.xlane.xlu0 %1840
    %1842 = vadd.xlane.f32.xlu0 %v1811
    %v1843 = vpop.xlane.xlu0 %1842
    %1844 = vadd.xlane.f32.xlu0 %v1813
    %v1845 = vpop.xlane.xlu0 %1844
    %1846 = vadd.xlane.f32.xlu0 %v1815
    %v1847 = vpop.xlane.xlu0 %1846
    %1848 = vadd.xlane.f32.xlu0 %v1817
    %v1849 = vpop.xlane.xlu0 %1848
    %1850 = vadd.xlane.f32.xlu0 %v1819
    %v1851 = vpop.xlane.xlu0 %1850
    %1852 = vadd.xlane.f32.xlu0 %v1821
    %v1853 = vpop.xlane.xlu0 %1852
    %1854 = vadd.xlane.f32.xlu0 %v1823
    %v1855 = vpop.xlane.xlu0 %1854
    %1856 = vadd.xlane.f32.xlu0 %v1825
    %v1857 = vpop.xlane.xlu0 %1856
    %1858 = vadd.xlane.f32.xlu0 %v1827
    %v1859 = vpop.xlane.xlu0 %1858
    %1860 = vadd.xlane.f32.xlu0 %v1829
    %v1861 = vpop.xlane.xlu0 %1860
    %1862 = vadd.xlane.f32.xlu0 %v1831
    %v1863 = vpop.xlane.xlu0 %1862
    %1864 = vadd.xlane.f32.xlu0 %v1833
    %v1865 = vpop.xlane.xlu0 %1864
    %1866 = vrot.lane.b32.xlu0 %v66, 112
    %v1867 = vpop.permute.xlu0 %1866
    %1868 = vrot.lane.b32.xlu0 %v67, 112
    %v1869 = vpop.permute.xlu0 %1868
    %1870 = vrot.lane.b32.xlu0 %v68, 112
    %v1871 = vpop.permute.xlu0 %1870
    %1872 = vrot.lane.b32.xlu0 %v69, 112
    %v1873 = vpop.permute.xlu0 %1872
    %1874 = vrot.lane.b32.xlu0 %v70, 112
    %v1875 = vpop.permute.xlu0 %1874
    %1876 = vrot.lane.b32.xlu0 %v71, 112
    %v1877 = vpop.permute.xlu0 %1876
    %1878 = vrot.lane.b32.xlu0 %v72, 112
    %v1879 = vpop.permute.xlu0 %1878
    %1880 = vrot.lane.b32.xlu0 %v73, 112
    %v1881 = vpop.permute.xlu0 %1880
    %1882 = vrot.lane.b32.xlu0 %v74, 112
    %v1883 = vpop.permute.xlu0 %1882
    %1884 = vrot.lane.b32.xlu0 %v75, 112
    %v1885 = vpop.permute.xlu0 %1884
    %1886 = vrot.lane.b32.xlu0 %v76, 112
    %v1887 = vpop.permute.xlu0 %1886
    %1888 = vrot.lane.b32.xlu0 %v77, 112
    %v1889 = vpop.permute.xlu0 %1888
    %1890 = vrot.lane.b32.xlu0 %v78, 112
    %v1891 = vpop.permute.xlu0 %1890
    %1892 = vrot.lane.b32.xlu0 %v79, 112
    %v1893 = vpop.permute.xlu0 %1892
    %1894 = vrot.lane.b32.xlu0 %v80, 112
    %v1895 = vpop.permute.xlu0 %1894
    %1896 = vrot.lane.b32.xlu0 %v81, 112
    %v1897 = vpop.permute.xlu0 %1896
    %1914 = vmatprep.subr.mxu0 0.0
    %1915 = vmatpush1.msra.mxu0 %v1867
    %1916 = vmatprep.subr.mxu0 0.0
    %1917 = vmatpush1.msra.mxu0 %v1869
    %1918 = vmatprep.subr.mxu0 0.0
    %1919 = vmatpush1.msra.mxu0 %v1871
    %1920 = vmatprep.subr.mxu0 0.0
    %1921 = vmatpush1.msra.mxu0 %v1873
    %1922 = vmatprep.subr.mxu0 0.0
    %1923 = vmatpush1.msra.mxu0 %v1875
    %1924 = vmatprep.subr.mxu0 0.0
    %1925 = vmatpush1.msra.mxu0 %v1877
    %1926 = vmatprep.subr.mxu0 0.0
    %1927 = vmatpush1.msra.mxu0 %v1879
    %1928 = vmatprep.subr.mxu0 0.0
    %1929 = vmatpush1.msra.mxu0 %v1881
    %1930 = vmatprep.subr.mxu0 0.0
    %1931 = vmatpush1.msra.mxu0 %v1883
    %1932 = vmatprep.subr.mxu0 0.0
    %1933 = vmatpush1.msra.mxu0 %v1885
    %1934 = vmatprep.subr.mxu0 0.0
    %1935 = vmatpush1.msra.mxu0 %v1887
    %1936 = vmatprep.subr.mxu0 0.0
    %1937 = vmatpush1.msra.mxu0 %v1889
    %1938 = vmatprep.subr.mxu0 0.0
    %1939 = vmatpush1.msra.mxu0 %v1891
    %1940 = vmatprep.subr.mxu0 0.0
    %1941 = vmatpush1.msra.mxu0 %v1893
    %1942 = vmatprep.subr.mxu0 0.0
    %1943 = vmatpush1.msra.mxu0 %v1895
    %1944 = vmatprep.subr.mxu0 0.0
    %1945 = vmatpush1.msra.mxu0 %v1897
    %1946 = vmatprep.subr.mxu0 0.0
    %1947 = vmatpush1.msra.mxu0 0.0
    %1948 = vmatprep.subr.mxu0 0.0
    %1949 = vmatpush1.msra.mxu0 0.0
    %1950 = vmatprep.subr.mxu0 0.0
    %1951 = vmatpush1.msra.mxu0 0.0
    %1952 = vmatprep.subr.mxu0 0.0
    %1953 = vmatpush1.msra.mxu0 0.0
    %1954 = vmatprep.subr.mxu0 0.0
    %1955 = vmatpush1.msra.mxu0 0.0
    %1956 = vmatprep.subr.mxu0 0.0
    %1957 = vmatpush1.msra.mxu0 0.0
    %1958 = vmatprep.subr.mxu0 0.0
    %1959 = vmatpush1.msra.mxu0 0.0
    %1960 = vmatprep.subr.mxu0 0.0
    %1961 = vmatpush1.msra.mxu0 0.0
    %1962 = vmatprep.subr.mxu0 0.0
    %1963 = vmatpush1.msra.mxu0 0.0
    %1964 = vmatprep.subr.mxu0 0.0
    %1965 = vmatpush1.msra.mxu0 0.0
    %1966 = vmatprep.subr.mxu0 0.0
    %1967 = vmatpush1.msra.mxu0 0.0
    %1968 = vmatprep.subr.mxu0 0.0
    %1969 = vmatpush1.msra.mxu0 0.0
    %1970 = vmatprep.subr.mxu0 0.0
    %1971 = vmatpush1.msra.mxu0 0.0
    %1972 = vmatprep.subr.mxu0 0.0
    %1973 = vmatpush1.msra.mxu0 0.0
    %1974 = vmatprep.subr.mxu0 0.0
    %1975 = vmatpush1.msra.mxu0 0.0
    %1976 = vmatprep.subr.mxu0 0.0
    %1977 = vmatpush1.msra.mxu0 0.0
    %1978 = vmatprep.mubr.f32.mxu0 0.0
    %1979 = vmatmul.mubr.f32.gmra.mrb[0].mxu0 %v1803
    %v1980 = vpop.f32.mrb[0].mxu0
    %v1981 = vadd.f32 0.0, %v1980
    %v1982 = vpop.f32.mrb[0].mxu0
    %1983 = vmatprep.mubr.f32.mxu0 0.0
    %1984 = vmatmul.mubr.f32.gmra.mrb[0].mxu0 %v1805
    %v1985 = vpop.f32.mrb[0].mxu0
    %v1986 = vadd.f32 0.0, %v1985
    %v1987 = vpop.f32.mrb[0].mxu0
    %1988 = vmatprep.mubr.f32.mxu0 0.0
    %1989 = vmatmul.mubr.f32.gmra.mrb[0].mxu0 %v1807
    %v1990 = vpop.f32.mrb[0].mxu0
    %v1991 = vadd.f32 0.0, %v1990
    %v1992 = vpop.f32.mrb[0].mxu0
    %1993 = vmatprep.mubr.f32.mxu0 0.0
    %1994 = vmatmul.mubr.f32.gmra.mrb[0].mxu0 %v1809
    %v1995 = vpop.f32.mrb[0].mxu0
    %v1996 = vadd.f32 0.0, %v1995
    %v1997 = vpop.f32.mrb[0].mxu0
    %1998 = vmatprep.mubr.f32.mxu0 0.0
    %1999 = vmatmul.mubr.f32.gmra.mrb[0].mxu0 %v1811
    %v2000 = vpop.f32.mrb[0].mxu0
    %v2001 = vadd.f32 0.0, %v2000
    %v2002 = vpop.f32.mrb[0].mxu0
    %2003 = vmatprep.mubr.f32.mxu0 0.0
    %2004 = vmatmul.mubr.f32.gmra.mrb[0].mxu0 %v1813
    %v2005 = vpop.f32.mrb[0].mxu0
    %v2006 = vadd.f32 0.0, %v2005
    %v2007 = vpop.f32.mrb[0].mxu0
    %2008 = vmatprep.mubr.f32.mxu0 0.0
    %2009 = vmatmul.mubr.f32.gmra.mrb[0].mxu0 %v1815
    %v2010 = vpop.f32.mrb[0].mxu0
    %v2011 = vadd.f32 0.0, %v2010
    %v2012 = vpop.f32.mrb[0].mxu0
    %2013 = vmatprep.mubr.f32.mxu0 0.0
    %2014 = vmatmul.mubr.f32.gmra.mrb[0].mxu0 %v1817
    %v2015 = vpop.f32.mrb[0].mxu0
    %v2016 = vadd.f32 0.0, %v2015
    %v2017 = vpop.f32.mrb[0].mxu0
    %2018 = vmatprep.mubr.f32.mxu0 0.0
    %2019 = vmatmul.mubr.f32.gmra.mrb[0].mxu0 %v1819
    %v2020 = vpop.f32.mrb[0].mxu0
    %v2021 = vadd.f32 0.0, %v2020
    %v2022 = vpop.f32.mrb[0].mxu0
    %2023 = vmatprep.mubr.f32.mxu0 0.0
    %2024 = vmatmul.mubr.f32.gmra.mrb[0].mxu0 %v1821
    %v2025 = vpop.f32.mrb[0].mxu0
    %v2026 = vadd.f32 0.0, %v2025
    %v2027 = vpop.f32.mrb[0].mxu0
    %2028 = vmatprep.mubr.f32.mxu0 0.0
    %2029 = vmatmul.mubr.f32.gmra.mrb[0].mxu0 %v1823
    %v2030 = vpop.f32.mrb[0].mxu0
    %v2031 = vadd.f32 0.0, %v2030
    %v2032 = vpop.f32.mrb[0].mxu0
    %2033 = vmatprep.mubr.f32.mxu0 0.0
    %2034 = vmatmul.mubr.f32.gmra.mrb[0].mxu0 %v1825
    %v2035 = vpop.f32.mrb[0].mxu0
    %v2036 = vadd.f32 0.0, %v2035
    %v2037 = vpop.f32.mrb[0].mxu0
    %2038 = vmatprep.mubr.f32.mxu0 0.0
    %2039 = vmatmul.mubr.f32.gmra.mrb[0].mxu0 %v1827
    %v2040 = vpop.f32.mrb[0].mxu0
    %v2041 = vadd.f32 0.0, %v2040
    %v2042 = vpop.f32.mrb[0].mxu0
    %2043 = vmatprep.mubr.f32.mxu0 0.0
    %2044 = vmatmul.mubr.f32.gmra.mrb[0].mxu0 %v1829
    %v2045 = vpop.f32.mrb[0].mxu0
    %v2046 = vadd.f32 0.0, %v2045
    %v2047 = vpop.f32.mrb[0].mxu0
    %2048 = vmatprep.mubr.f32.mxu0 0.0
    %2049 = vmatmul.mubr.f32.gmra.mrb[0].mxu0 %v1831
    %v2050 = vpop.f32.mrb[0].mxu0
    %v2051 = vadd.f32 0.0, %v2050
    %v2052 = vpop.f32.mrb[0].mxu0
    %2053 = vmatprep.mubr.f32.mxu0 0.0
    %2054 = vmatmul.mubr.f32.gmra.mrb[0].mxu0 %v1833
    %v2055 = vpop.f32.mrb[0].mxu0
    %v2056 = vadd.f32 0.0, %v2055
    %v2057 = vpop.f32.mrb[0].mxu0
    %2058 = vdwg.mxu0
    %v2059 = vrcp.pop %v1835
    %v2060 = vmul.f32 1.0, %v2059
    %v2061 = vrcp.pop %v1837
    %v2062 = vmul.f32 1.0, %v2061
    %v2063 = vrcp.pop %v1839
    %v2064 = vmul.f32 1.0, %v2063
    %v2065 = vrcp.pop %v1841
    %v2066 = vmul.f32 1.0, %v2065
    %v2067 = vrcp.pop %v1843
    %v2068 = vmul.f32 1.0, %v2067
    %v2069 = vrcp.pop %v1845
    %v2070 = vmul.f32 1.0, %v2069
    %v2071 = vrcp.pop %v1847
    %v2072 = vmul.f32 1.0, %v2071
    %v2073 = vrcp.pop %v1849
    %v2074 = vmul.f32 1.0, %v2073
    %v2075 = vrcp.pop %v1851
    %v2076 = vmul.f32 1.0, %v2075
    %v2077 = vrcp.pop %v1853
    %v2078 = vmul.f32 1.0, %v2077
    %v2079 = vrcp.pop %v1855
    %v2080 = vmul.f32 1.0, %v2079
    %v2081 = vrcp.pop %v1857
    %v2082 = vmul.f32 1.0, %v2081
    %v2083 = vrcp.pop %v1859
    %v2084 = vmul.f32 1.0, %v2083
    %v2085 = vrcp.pop %v1861
    %v2086 = vmul.f32 1.0, %v2085
    %v2087 = vrcp.pop %v1863
    %v2088 = vmul.f32 1.0, %v2087
    %v2089 = vrcp.pop %v1865
    %v2090 = vmul.f32 1.0, %v2089
    %v2091 = vmul.f32 %v1981, %v2060
    %v2092 = vmul.f32 %v1986, %v2062
    %v2093 = vmul.f32 %v1991, %v2064
    %v2094 = vmul.f32 %v1996, %v2066
    %v2095 = vmul.f32 %v2001, %v2068
    %v2096 = vmul.f32 %v2006, %v2070
    %v2097 = vmul.f32 %v2011, %v2072
    %v2098 = vmul.f32 %v2016, %v2074
    %v2099 = vmul.f32 %v2021, %v2076
    %v2100 = vmul.f32 %v2026, %v2078
    %v2101 = vmul.f32 %v2031, %v2080
    %v2102 = vmul.f32 %v2036, %v2082
    %v2103 = vmul.f32 %v2041, %v2084
    %v2104 = vmul.f32 %v2046, %v2086
    %v2105 = vmul.f32 %v2051, %v2088
    %v2106 = vmul.f32 %v2056, %v2090
    %2107 = vrot.lane.b32.xlu0 %v34, 104
    %v2108 = vpop.permute.xlu0 %2107
    %2109 = vrot.lane.b32.xlu0 %v35, 104
    %v2110 = vpop.permute.xlu0 %2109
    %2111 = vrot.lane.b32.xlu0 %v36, 104
    %v2112 = vpop.permute.xlu0 %2111
    %2113 = vrot.lane.b32.xlu0 %v37, 104
    %v2114 = vpop.permute.xlu0 %2113
    %2115 = vrot.lane.b32.xlu0 %v38, 104
    %v2116 = vpop.permute.xlu0 %2115
    %2117 = vrot.lane.b32.xlu0 %v39, 104
    %v2118 = vpop.permute.xlu0 %2117
    %2119 = vrot.lane.b32.xlu0 %v40, 104
    %v2120 = vpop.permute.xlu0 %2119
    %2121 = vrot.lane.b32.xlu0 %v41, 104
    %v2122 = vpop.permute.xlu0 %2121
    %2123 = vrot.lane.b32.xlu0 %v42, 104
    %v2124 = vpop.permute.xlu0 %2123
    %2125 = vrot.lane.b32.xlu0 %v43, 104
    %v2126 = vpop.permute.xlu0 %2125
    %2127 = vrot.lane.b32.xlu0 %v44, 104
    %v2128 = vpop.permute.xlu0 %2127
    %2129 = vrot.lane.b32.xlu0 %v45, 104
    %v2130 = vpop.permute.xlu0 %2129
    %2131 = vrot.lane.b32.xlu0 %v46, 104
    %v2132 = vpop.permute.xlu0 %2131
    %2133 = vrot.lane.b32.xlu0 %v47, 104
    %v2134 = vpop.permute.xlu0 %2133
    %2135 = vrot.lane.b32.xlu0 %v48, 104
    %v2136 = vpop.permute.xlu0 %2135
    %2137 = vrot.lane.b32.xlu0 %v49, 104
    %v2138 = vpop.permute.xlu0 %2137
    %2139 = vrot.lane.b32.xlu0 %v50, 104
    %v2140 = vpop.permute.xlu0 %2139
    %2141 = vrot.lane.b32.xlu0 %v51, 104
    %v2142 = vpop.permute.xlu0 %2141
    %2143 = vrot.lane.b32.xlu0 %v52, 104
    %v2144 = vpop.permute.xlu0 %2143
    %2145 = vrot.lane.b32.xlu0 %v53, 104
    %v2146 = vpop.permute.xlu0 %2145
    %2147 = vrot.lane.b32.xlu0 %v54, 104
    %v2148 = vpop.permute.xlu0 %2147
    %2149 = vrot.lane.b32.xlu0 %v55, 104
    %v2150 = vpop.permute.xlu0 %2149
    %2151 = vrot.lane.b32.xlu0 %v56, 104
    %v2152 = vpop.permute.xlu0 %2151
    %2153 = vrot.lane.b32.xlu0 %v57, 104
    %v2154 = vpop.permute.xlu0 %2153
    %2155 = vrot.lane.b32.xlu0 %v58, 104
    %v2156 = vpop.permute.xlu0 %2155
    %2157 = vrot.lane.b32.xlu0 %v59, 104
    %v2158 = vpop.permute.xlu0 %2157
    %2159 = vrot.lane.b32.xlu0 %v60, 104
    %v2160 = vpop.permute.xlu0 %2159
    %2161 = vrot.lane.b32.xlu0 %v61, 104
    %v2162 = vpop.permute.xlu0 %2161
    %2163 = vrot.lane.b32.xlu0 %v62, 104
    %v2164 = vpop.permute.xlu0 %2163
    %2165 = vrot.lane.b32.xlu0 %v63, 104
    %v2166 = vpop.permute.xlu0 %2165
    %2167 = vrot.lane.b32.xlu0 %v64, 104
    %v2168 = vpop.permute.xlu0 %2167
    %2169 = vrot.lane.b32.xlu0 %v65, 104
    %v2170 = vpop.permute.xlu0 %2169
    %v2171 = vsel %vm98, %v2108, 0
    %v2173 = vsel %vm98, %v2110, 0
    %v2175 = vsel %vm98, %v2112, 0
    %v2177 = vsel %vm98, %v2114, 0
    %v2179 = vsel %vm98, %v2116, 0
    %v2181 = vsel %vm98, %v2118, 0
    %v2183 = vsel %vm98, %v2120, 0
    %v2185 = vsel %vm98, %v2122, 0
    %v2187 = vsel %vm98, %v2124, 0
    %v2189 = vsel %vm98, %v2126, 0
    %v2191 = vsel %vm98, %v2128, 0
    %v2193 = vsel %vm98, %v2130, 0
    %v2195 = vsel %vm98, %v2132, 0
    %v2197 = vsel %vm98, %v2134, 0
    %v2199 = vsel %vm98, %v2136, 0
    %v2201 = vsel %vm98, %v2138, 0
    %v2203 = vsel %vm98, %v2140, 0
    %v2205 = vsel %vm98, %v2142, 0
    %v2207 = vsel %vm98, %v2144, 0
    %v2209 = vsel %vm98, %v2146, 0
    %v2211 = vsel %vm98, %v2148, 0
    %v2213 = vsel %vm98, %v2150, 0
    %v2215 = vsel %vm98, %v2152, 0
    %v2217 = vsel %vm98, %v2154, 0
    %v2219 = vsel %vm98, %v2156, 0
    %v2221 = vsel %vm98, %v2158, 0
    %v2223 = vsel %vm98, %v2160, 0
    %v2225 = vsel %vm98, %v2162, 0
    %v2227 = vsel %vm98, %v2164, 0
    %v2229 = vsel %vm98, %v2166, 0
    %v2231 = vsel %vm98, %v2168, 0
    %v2233 = vsel %vm98, %v2170, 0
    %2235 = vmatprep.subr.mxu0 0.0
    %2236 = vmatpush1.xpose.msra.mxu0 %v2203
    %2237 = vmatprep.subr.mxu0 0.0
    %2238 = vmatpush1.xpose.msra.mxu0 %v2205
    %2239 = vmatprep.subr.mxu0 0.0
    %2240 = vmatpush1.xpose.msra.mxu0 %v2207
    %2241 = vmatprep.subr.mxu0 0.0
    %2242 = vmatpush1.xpose.msra.mxu0 %v2209
    %2243 = vmatprep.subr.mxu0 0.0
    %2244 = vmatpush1.xpose.msra.mxu0 %v2211
    %2245 = vmatprep.subr.mxu0 0.0
    %2246 = vmatpush1.xpose.msra.mxu0 %v2213
    %2247 = vmatprep.subr.mxu0 0.0
    %2248 = vmatpush1.xpose.msra.mxu0 %v2215
    %2249 = vmatprep.subr.mxu0 0.0
    %2250 = vmatpush1.xpose.msra.mxu0 %v2217
    %2251 = vmatprep.subr.mxu0 0.0
    %2252 = vmatpush1.xpose.msra.mxu0 %v2219
    %2253 = vmatprep.subr.mxu0 0.0
    %2254 = vmatpush1.xpose.msra.mxu0 %v2221
    %2255 = vmatprep.subr.mxu0 0.0
    %2256 = vmatpush1.xpose.msra.mxu0 %v2223
    %2257 = vmatprep.subr.mxu0 0.0
    %2258 = vmatpush1.xpose.msra.mxu0 %v2225
    %2259 = vmatprep.subr.mxu0 0.0
    %2260 = vmatpush1.xpose.msra.mxu0 %v2227
    %2261 = vmatprep.subr.mxu0 0.0
    %2262 = vmatpush1.xpose.msra.mxu0 %v2229
    %2263 = vmatprep.subr.mxu0 0.0
    %2264 = vmatpush1.xpose.msra.mxu0 %v2231
    %2265 = vmatprep.subr.mxu0 0.0
    %2266 = vmatpush1.xpose.msra.mxu0 %v2233
    %2267 = vmatprep.subr.mxu0 0.0
    %2268 = vmatpush1.xpose.msra.mxu0 0.0
    %2269 = vmatprep.subr.mxu0 0.0
    %2270 = vmatpush1.xpose.msra.mxu0 0.0
    %2271 = vmatprep.subr.mxu0 0.0
    %2272 = vmatpush1.xpose.msra.mxu0 0.0
    %2273 = vmatprep.subr.mxu0 0.0
    %2274 = vmatpush1.xpose.msra.mxu0 0.0
    %2275 = vmatprep.subr.mxu0 0.0
    %2276 = vmatpush1.xpose.msra.mxu0 0.0
    %2277 = vmatprep.subr.mxu0 0.0
    %2278 = vmatpush1.xpose.msra.mxu0 0.0
    %2279 = vmatprep.subr.mxu0 0.0
    %2280 = vmatpush1.xpose.msra.mxu0 0.0
    %2281 = vmatprep.subr.mxu0 0.0
    %2282 = vmatpush1.xpose.msra.mxu0 0.0
    %2283 = vmatprep.subr.mxu0 0.0
    %2284 = vmatpush1.xpose.msra.mxu0 0.0
    %2285 = vmatprep.subr.mxu0 0.0
    %2286 = vmatpush1.xpose.msra.mxu0 0.0
    %2287 = vmatprep.subr.mxu0 0.0
    %2288 = vmatpush1.xpose.msra.mxu0 0.0
    %2289 = vmatprep.subr.mxu0 0.0
    %2290 = vmatpush1.xpose.msra.mxu0 0.0
    %2291 = vmatprep.subr.mxu0 0.0
    %2292 = vmatpush1.xpose.msra.mxu0 0.0
    %2293 = vmatprep.subr.mxu0 0.0
    %2294 = vmatpush1.xpose.msra.mxu0 0.0
    %2295 = vmatprep.subr.mxu0 0.0
    %2296 = vmatpush1.xpose.msra.mxu0 0.0
    %2297 = vmatprep.subr.mxu0 0.0
    %2298 = vmatpush1.xpose.msra.mxu0 0.0
    %2299 = vmatprep.mubr.f32.mxu0 0.0
    %2300 = vmatmul.mubr.f32.gmra.mrb[0].mxu0 %v2171
    %v2301 = vpop.f32.mrb[0].mxu0
    %v2302 = vadd.f32 0.0, %v2301
    %v2303 = vpop.f32.mrb[0].mxu0
    %2304 = vmatprep.mubr.f32.mxu0 0.0
    %2305 = vmatmul.mubr.f32.gmra.mrb[0].mxu0 %v2173
    %v2306 = vpop.f32.mrb[0].mxu0
    %v2307 = vadd.f32 0.0, %v2306
    %v2308 = vpop.f32.mrb[0].mxu0
    %2309 = vmatprep.mubr.f32.mxu0 0.0
    %2310 = vmatmul.mubr.f32.gmra.mrb[0].mxu0 %v2175
    %v2311 = vpop.f32.mrb[0].mxu0
    %v2312 = vadd.f32 0.0, %v2311
    %v2313 = vpop.f32.mrb[0].mxu0
    %2314 = vmatprep.mubr.f32.mxu0 0.0
    %2315 = vmatmul.mubr.f32.gmra.mrb[0].mxu0 %v2177
    %v2316 = vpop.f32.mrb[0].mxu0
    %v2317 = vadd.f32 0.0, %v2316
    %v2318 = vpop.f32.mrb[0].mxu0
    %2319 = vmatprep.mubr.f32.mxu0 0.0
    %2320 = vmatmul.mubr.f32.gmra.mrb[0].mxu0 %v2179
    %v2321 = vpop.f32.mrb[0].mxu0
    %v2322 = vadd.f32 0.0, %v2321
    %v2323 = vpop.f32.mrb[0].mxu0
    %2324 = vmatprep.mubr.f32.mxu0 0.0
    %2325 = vmatmul.mubr.f32.gmra.mrb[0].mxu0 %v2181
    %v2326 = vpop.f32.mrb[0].mxu0
    %v2327 = vadd.f32 0.0, %v2326
    %v2328 = vpop.f32.mrb[0].mxu0
    %2329 = vmatprep.mubr.f32.mxu0 0.0
    %2330 = vmatmul.mubr.f32.gmra.mrb[0].mxu0 %v2183
    %v2331 = vpop.f32.mrb[0].mxu0
    %v2332 = vadd.f32 0.0, %v2331
    %v2333 = vpop.f32.mrb[0].mxu0
    %2334 = vmatprep.mubr.f32.mxu0 0.0
    %2335 = vmatmul.mubr.f32.gmra.mrb[0].mxu0 %v2185
    %v2336 = vpop.f32.mrb[0].mxu0
    %v2337 = vadd.f32 0.0, %v2336
    %v2338 = vpop.f32.mrb[0].mxu0
    %2339 = vmatprep.mubr.f32.mxu0 0.0
    %2340 = vmatmul.mubr.f32.gmra.mrb[0].mxu0 %v2187
    %v2341 = vpop.f32.mrb[0].mxu0
    %v2342 = vadd.f32 0.0, %v2341
    %v2343 = vpop.f32.mrb[0].mxu0
    %2344 = vmatprep.mubr.f32.mxu0 0.0
    %2345 = vmatmul.mubr.f32.gmra.mrb[0].mxu0 %v2189
    %v2346 = vpop.f32.mrb[0].mxu0
    %v2347 = vadd.f32 0.0, %v2346
    %v2348 = vpop.f32.mrb[0].mxu0
    %2349 = vmatprep.mubr.f32.mxu0 0.0
    %2350 = vmatmul.mubr.f32.gmra.mrb[0].mxu0 %v2191
    %v2351 = vpop.f32.mrb[0].mxu0
    %v2352 = vadd.f32 0.0, %v2351
    %v2353 = vpop.f32.mrb[0].mxu0
    %2354 = vmatprep.mubr.f32.mxu0 0.0
    %2355 = vmatmul.mubr.f32.gmra.mrb[0].mxu0 %v2193
    %v2356 = vpop.f32.mrb[0].mxu0
    %v2357 = vadd.f32 0.0, %v2356
    %v2358 = vpop.f32.mrb[0].mxu0
    %2359 = vmatprep.mubr.f32.mxu0 0.0
    %2360 = vmatmul.mubr.f32.gmra.mrb[0].mxu0 %v2195
    %v2361 = vpop.f32.mrb[0].mxu0
    %v2362 = vadd.f32 0.0, %v2361
    %v2363 = vpop.f32.mrb[0].mxu0
    %2364 = vmatprep.mubr.f32.mxu0 0.0
    %2365 = vmatmul.mubr.f32.gmra.mrb[0].mxu0 %v2197
    %v2366 = vpop.f32.mrb[0].mxu0
    %v2367 = vadd.f32 0.0, %v2366
    %v2368 = vpop.f32.mrb[0].mxu0
    %2369 = vmatprep.mubr.f32.mxu0 0.0
    %2370 = vmatmul.mubr.f32.gmra.mrb[0].mxu0 %v2199
    %v2371 = vpop.f32.mrb[0].mxu0
    %v2372 = vadd.f32 0.0, %v2371
    %v2373 = vpop.f32.mrb[0].mxu0
    %2374 = vmatprep.mubr.f32.mxu0 0.0
    %2375 = vmatmul.mubr.f32.gmra.mrb[0].mxu0 %v2201
    %v2376 = vpop.f32.mrb[0].mxu0
    %v2377 = vadd.f32 0.0, %v2376
    %v2378 = vpop.f32.mrb[0].mxu0
    %2379 = vdwg.mxu0
    %v2380 = vmul.f32 %v2302, 0.35355338
    %v2381 = vmul.f32 %v2307, 0.35355338
    %v2382 = vmul.f32 %v2312, 0.35355338
    %v2383 = vmul.f32 %v2317, 0.35355338
    %v2384 = vmul.f32 %v2322, 0.35355338
    %v2385 = vmul.f32 %v2327, 0.35355338
    %v2386 = vmul.f32 %v2332, 0.35355338
    %v2387 = vmul.f32 %v2337, 0.35355338
    %v2388 = vmul.f32 %v2342, 0.35355338
    %v2389 = vmul.f32 %v2347, 0.35355338
    %v2390 = vmul.f32 %v2352, 0.35355338
    %v2391 = vmul.f32 %v2357, 0.35355338
    %v2392 = vmul.f32 %v2362, 0.35355338
    %v2393 = vmul.f32 %v2367, 0.35355338
    %v2394 = vmul.f32 %v2372, 0.35355338
    %v2395 = vmul.f32 %v2377, 0.35355338
    %s2396 = scalar_lea.vmem [#allocation2], 384
    %v2397 = vld [vmem:[%s2396] sm:$0xff]
    %v2398 = vld [vmem:[%s2396 + $0x8] sm:$0xff]
    %v2399 = vld [vmem:[%s2396 + $0x10] sm:$0xff]
    %v2400 = vld [vmem:[%s2396 + $0x18] sm:$0xff]
    %v2401 = vld [vmem:[%s2396 + $0x20] sm:$0xff]
    %v2402 = vld [vmem:[%s2396 + $0x28] sm:$0xff]
    %v2403 = vld [vmem:[%s2396 + $0x30] sm:$0xff]
    %v2404 = vld [vmem:[%s2396 + $0x38] sm:$0xff]
    %v2405 = vld [vmem:[%s2396 + $0x40] sm:$0xff]
    %v2406 = vld [vmem:[%s2396 + $0x48] sm:$0xff]
    %v2407 = vld [vmem:[%s2396 + $0x50] sm:$0xff]
    %v2408 = vld [vmem:[%s2396 + $0x58] sm:$0xff]
    %v2409 = vld [vmem:[%s2396 + $0x60] sm:$0xff]
    %v2410 = vld [vmem:[%s2396 + $0x68] sm:$0xff]
    %v2411 = vld [vmem:[%s2396 + $0x70] sm:$0xff]
    %v2412 = vld [vmem:[%s2396 + $0x78] sm:$0xff]
    %v2413 = vadd.f32 %v2380, %v2397
    %v2414 = vadd.f32 %v2381, %v2398
    %v2415 = vadd.f32 %v2382, %v2399
    %v2416 = vadd.f32 %v2383, %v2400
    %v2417 = vadd.f32 %v2384, %v2401
    %v2418 = vadd.f32 %v2385, %v2402
    %v2419 = vadd.f32 %v2386, %v2403
    %v2420 = vadd.f32 %v2387, %v2404
    %v2421 = vadd.f32 %v2388, %v2405
    %v2422 = vadd.f32 %v2389, %v2406
    %v2423 = vadd.f32 %v2390, %v2407
    %v2424 = vadd.f32 %v2391, %v2408
    %v2425 = vadd.f32 %v2392, %v2409
    %v2426 = vadd.f32 %v2393, %v2410
    %v2427 = vadd.f32 %v2394, %v2411
    %v2428 = vadd.f32 %v2395, %v2412
    %v2429 = vadd.f32 %v2413, %v82
    %v2430 = vadd.f32 %v2414, %v83
    %v2431 = vadd.f32 %v2415, %v84
    %v2432 = vadd.f32 %v2416, %v85
    %v2433 = vadd.f32 %v2417, %v86
    %v2434 = vadd.f32 %v2418, %v87
    %v2435 = vadd.f32 %v2419, %v88
    %v2436 = vadd.f32 %v2420, %v89
    %v2437 = vadd.f32 %v2421, %v90
    %v2438 = vadd.f32 %v2422, %v91
    %v2439 = vadd.f32 %v2423, %v92
    %v2440 = vadd.f32 %v2424, %v93
    %v2441 = vadd.f32 %v2425, %v94
    %v2442 = vadd.f32 %v2426, %v95
    %v2443 = vadd.f32 %v2427, %v96
    %v2444 = vadd.f32 %v2428, %v97
    %2445 = vmax.xlane.f32.xlu0 %v2429
    %v2446 = vpop.xlane.xlu0 %2445
    %2447 = vmax.xlane.f32.xlu0 %v2430
    %v2448 = vpop.xlane.xlu0 %2447
    %2449 = vmax.xlane.f32.xlu0 %v2431
    %v2450 = vpop.xlane.xlu0 %2449
    %2451 = vmax.xlane.f32.xlu0 %v2432
    %v2452 = vpop.xlane.xlu0 %2451
    %2453 = vmax.xlane.f32.xlu0 %v2433
    %v2454 = vpop.xlane.xlu0 %2453
    %2455 = vmax.xlane.f32.xlu0 %v2434
    %v2456 = vpop.xlane.xlu0 %2455
    %2457 = vmax.xlane.f32.xlu0 %v2435
    %v2458 = vpop.xlane.xlu0 %2457
    %2459 = vmax.xlane.f32.xlu0 %v2436
    %v2460 = vpop.xlane.xlu0 %2459
    %2461 = vmax.xlane.f32.xlu0 %v2437
    %v2462 = vpop.xlane.xlu0 %2461
    %2463 = vmax.xlane.f32.xlu0 %v2438
    %v2464 = vpop.xlane.xlu0 %2463
    %2465 = vmax.xlane.f32.xlu0 %v2439
    %v2466 = vpop.xlane.xlu0 %2465
    %2467 = vmax.xlane.f32.xlu0 %v2440
    %v2468 = vpop.xlane.xlu0 %2467
    %2469 = vmax.xlane.f32.xlu0 %v2441
    %v2470 = vpop.xlane.xlu0 %2469
    %2471 = vmax.xlane.f32.xlu0 %v2442
    %v2472 = vpop.xlane.xlu0 %2471
    %2473 = vmax.xlane.f32.xlu0 %v2443
    %v2474 = vpop.xlane.xlu0 %2473
    %2475 = vmax.xlane.f32.xlu0 %v2444
    %v2476 = vpop.xlane.xlu0 %2475
    %v2477 = vsub.f32 %v2429, %v2446
    %v2478 = vsub.f32 %v2430, %v2448
    %v2479 = vsub.f32 %v2431, %v2450
    %v2480 = vsub.f32 %v2432, %v2452
    %v2481 = vsub.f32 %v2433, %v2454
    %v2482 = vsub.f32 %v2434, %v2456
    %v2483 = vsub.f32 %v2435, %v2458
    %v2484 = vsub.f32 %v2436, %v2460
    %v2485 = vsub.f32 %v2437, %v2462
    %v2486 = vsub.f32 %v2438, %v2464
    %v2487 = vsub.f32 %v2439, %v2466
    %v2488 = vsub.f32 %v2440, %v2468
    %v2489 = vsub.f32 %v2441, %v2470
    %v2490 = vsub.f32 %v2442, %v2472
    %v2491 = vsub.f32 %v2443, %v2474
    %v2492 = vsub.f32 %v2444, %v2476
    %v2493 = vmul.f32 %v2477, 1.442695
    %v2494 = vpow.pop %v2493
    %v2495 = vmul.f32 %v2478, 1.442695
    %v2496 = vpow.pop %v2495
    %v2497 = vmul.f32 %v2479, 1.442695
    %v2498 = vpow.pop %v2497
    %v2499 = vmul.f32 %v2480, 1.442695
    %v2500 = vpow.pop %v2499
    %v2501 = vmul.f32 %v2481, 1.442695
    %v2502 = vpow.pop %v2501
    %v2503 = vmul.f32 %v2482, 1.442695
    %v2504 = vpow.pop %v2503
    %v2505 = vmul.f32 %v2483, 1.442695
    %v2506 = vpow.pop %v2505
    %v2507 = vmul.f32 %v2484, 1.442695
    %v2508 = vpow.pop %v2507
    %v2509 = vmul.f32 %v2485, 1.442695
    %v2510 = vpow.pop %v2509
    %v2511 = vmul.f32 %v2486, 1.442695
    %v2512 = vpow.pop %v2511
    %v2513 = vmul.f32 %v2487, 1.442695
    %v2514 = vpow.pop %v2513
    %v2515 = vmul.f32 %v2488, 1.442695
    %v2516 = vpow.pop %v2515
    %v2517 = vmul.f32 %v2489, 1.442695
    %v2518 = vpow.pop %v2517
    %v2519 = vmul.f32 %v2490, 1.442695
    %v2520 = vpow.pop %v2519
    %v2521 = vmul.f32 %v2491, 1.442695
    %v2522 = vpow.pop %v2521
    %v2523 = vmul.f32 %v2492, 1.442695
    %v2524 = vpow.pop %v2523
    %2525 = vadd.xlane.f32.xlu0 %v2494
    %v2526 = vpop.xlane.xlu0 %2525
    %2527 = vadd.xlane.f32.xlu0 %v2496
    %v2528 = vpop.xlane.xlu0 %2527
    %2529 = vadd.xlane.f32.xlu0 %v2498
    %v2530 = vpop.xlane.xlu0 %2529
    %2531 = vadd.xlane.f32.xlu0 %v2500
    %v2532 = vpop.xlane.xlu0 %2531
    %2533 = vadd.xlane.f32.xlu0 %v2502
    %v2534 = vpop.xlane.xlu0 %2533
    %2535 = vadd.xlane.f32.xlu0 %v2504
    %v2536 = vpop.xlane.xlu0 %2535
    %2537 = vadd.xlane.f32.xlu0 %v2506
    %v2538 = vpop.xlane.xlu0 %2537
    %2539 = vadd.xlane.f32.xlu0 %v2508
    %v2540 = vpop.xlane.xlu0 %2539
    %2541 = vadd.xlane.f32.xlu0 %v2510
    %v2542 = vpop.xlane.xlu0 %2541
    %2543 = vadd.xlane.f32.xlu0 %v2512
    %v2544 = vpop.xlane.xlu0 %2543
    %2545 = vadd.xlane.f32.xlu0 %v2514
    %v2546 = vpop.xlane.xlu0 %2545
    %2547 = vadd.xlane.f32.xlu0 %v2516
    %v2548 = vpop.xlane.xlu0 %2547
    %2549 = vadd.xlane.f32.xlu0 %v2518
    %v2550 = vpop.xlane.xlu0 %2549
    %2551 = vadd.xlane.f32.xlu0 %v2520
    %v2552 = vpop.xlane.xlu0 %2551
    %2553 = vadd.xlane.f32.xlu0 %v2522
    %v2554 = vpop.xlane.xlu0 %2553
    %2555 = vadd.xlane.f32.xlu0 %v2524
    %v2556 = vpop.xlane.xlu0 %2555
    %2557 = vrot.lane.b32.xlu0 %v66, 104
    %v2558 = vpop.permute.xlu0 %2557
    %2559 = vrot.lane.b32.xlu0 %v67, 104
    %v2560 = vpop.permute.xlu0 %2559
    %2561 = vrot.lane.b32.xlu0 %v68, 104
    %v2562 = vpop.permute.xlu0 %2561
    %2563 = vrot.lane.b32.xlu0 %v69, 104
    %v2564 = vpop.permute.xlu0 %2563
    %2565 = vrot.lane.b32.xlu0 %v70, 104
    %v2566 = vpop.permute.xlu0 %2565
    %2567 = vrot.lane.b32.xlu0 %v71, 104
    %v2568 = vpop.permute.xlu0 %2567
    %2569 = vrot.lane.b32.xlu0 %v72, 104
    %v2570 = vpop.permute.xlu0 %2569
    %2571 = vrot.lane.b32.xlu0 %v73, 104
    %v2572 = vpop.permute.xlu0 %2571
    %2573 = vrot.lane.b32.xlu0 %v74, 104
    %v2574 = vpop.permute.xlu0 %2573
    %2575 = vrot.lane.b32.xlu0 %v75, 104
    %v2576 = vpop.permute.xlu0 %2575
    %2577 = vrot.lane.b32.xlu0 %v76, 104
    %v2578 = vpop.permute.xlu0 %2577
    %2579 = vrot.lane.b32.xlu0 %v77, 104
    %v2580 = vpop.permute.xlu0 %2579
    %2581 = vrot.lane.b32.xlu0 %v78, 104
    %v2582 = vpop.permute.xlu0 %2581
    %2583 = vrot.lane.b32.xlu0 %v79, 104
    %v2584 = vpop.permute.xlu0 %2583
    %2585 = vrot.lane.b32.xlu0 %v80, 104
    %v2586 = vpop.permute.xlu0 %2585
    %2587 = vrot.lane.b32.xlu0 %v81, 104
    %v2588 = vpop.permute.xlu0 %2587
    %2605 = vmatprep.subr.mxu0 0.0
    %2606 = vmatpush1.msra.mxu0 %v2558
    %2607 = vmatprep.subr.mxu0 0.0
    %2608 = vmatpush1.msra.mxu0 %v2560
    %2609 = vmatprep.subr.mxu0 0.0
    %2610 = vmatpush1.msra.mxu0 %v2562
    %2611 = vmatprep.subr.mxu0 0.0
    %2612 = vmatpush1.msra.mxu0 %v2564
    %2613 = vmatprep.subr.mxu0 0.0
    %2614 = vmatpush1.msra.mxu0 %v2566
    %2615 = vmatprep.subr.mxu0 0.0
    %2616 = vmatpush1.msra.mxu0 %v2568
    %2617 = vmatprep.subr.mxu0 0.0
    %2618 = vmatpush1.msra.mxu0 %v2570
    %2619 = vmatprep.subr.mxu0 0.0
    %2620 = vmatpush1.msra.mxu0 %v2572
    %2621 = vmatprep.subr.mxu0 0.0
    %2622 = vmatpush1.msra.mxu0 %v2574
    %2623 = vmatprep.subr.mxu0 0.0
    %2624 = vmatpush1.msra.mxu0 %v2576
    %2625 = vmatprep.subr.mxu0 0.0
    %2626 = vmatpush1.msra.mxu0 %v2578
    %2627 = vmatprep.subr.mxu0 0.0
    %2628 = vmatpush1.msra.mxu0 %v2580
    %2629 = vmatprep.subr.mxu0 0.0
    %2630 = vmatpush1.msra.mxu0 %v2582
    %2631 = vmatprep.subr.mxu0 0.0
    %2632 = vmatpush1.msra.mxu0 %v2584
    %2633 = vmatprep.subr.mxu0 0.0
    %2634 = vmatpush1.msra.mxu0 %v2586
    %2635 = vmatprep.subr.mxu0 0.0
    %2636 = vmatpush1.msra.mxu0 %v2588
    %2637 = vmatprep.subr.mxu0 0.0
    %2638 = vmatpush1.msra.mxu0 0.0
    %2639 = vmatprep.subr.mxu0 0.0
    %2640 = vmatpush1.msra.mxu0 0.0
    %2641 = vmatprep.subr.mxu0 0.0
    %2642 = vmatpush1.msra.mxu0 0.0
    %2643 = vmatprep.subr.mxu0 0.0
    %2644 = vmatpush1.msra.mxu0 0.0
    %2645 = vmatprep.subr.mxu0 0.0
    %2646 = vmatpush1.msra.mxu0 0.0
    %2647 = vmatprep.subr.mxu0 0.0
    %2648 = vmatpush1.msra.mxu0 0.0
    %2649 = vmatprep.subr.mxu0 0.0
    %2650 = vmatpush1.msra.mxu0 0.0
    %2651 = vmatprep.subr.mxu0 0.0
    %2652 = vmatpush1.msra.mxu0 0.0
    %2653 = vmatprep.subr.mxu0 0.0
    %2654 = vmatpush1.msra.mxu0 0.0
    %2655 = vmatprep.subr.mxu0 0.0
    %2656 = vmatpush1.msra.mxu0 0.0
    %2657 = vmatprep.subr.mxu0 0.0
    %2658 = vmatpush1.msra.mxu0 0.0
    %2659 = vmatprep.subr.mxu0 0.0
    %2660 = vmatpush1.msra.mxu0 0.0
    %2661 = vmatprep.subr.mxu0 0.0
    %2662 = vmatpush1.msra.mxu0 0.0
    %2663 = vmatprep.subr.mxu0 0.0
    %2664 = vmatpush1.msra.mxu0 0.0
    %2665 = vmatprep.subr.mxu0 0.0
    %2666 = vmatpush1.msra.mxu0 0.0
    %2667 = vmatprep.subr.mxu0 0.0
    %2668 = vmatpush1.msra.mxu0 0.0
    %2669 = vmatprep.mubr.f32.mxu0 0.0
    %2670 = vmatmul.mubr.f32.gmra.mrb[0].mxu0 %v2494
    %v2671 = vpop.f32.mrb[0].mxu0
    %v2672 = vadd.f32 0.0, %v2671
    %v2673 = vpop.f32.mrb[0].mxu0
    %2674 = vmatprep.mubr.f32.mxu0 0.0
    %2675 = vmatmul.mubr.f32.gmra.mrb[0].mxu0 %v2496
    %v2676 = vpop.f32.mrb[0].mxu0
    %v2677 = vadd.f32 0.0, %v2676
    %v2678 = vpop.f32.mrb[0].mxu0
    %2679 = vmatprep.mubr.f32.mxu0 0.0
    %2680 = vmatmul.mubr.f32.gmra.mrb[0].mxu0 %v2498
    %v2681 = vpop.f32.mrb[0].mxu0
    %v2682 = vadd.f32 0.0, %v2681
    %v2683 = vpop.f32.mrb[0].mxu0
    %2684 = vmatprep.mubr.f32.mxu0 0.0
    %2685 = vmatmul.mubr.f32.gmra.mrb[0].mxu0 %v2500
    %v2686 = vpop.f32.mrb[0].mxu0
    %v2687 = vadd.f32 0.0, %v2686
    %v2688 = vpop.f32.mrb[0].mxu0
    %2689 = vmatprep.mubr.f32.mxu0 0.0
    %2690 = vmatmul.mubr.f32.gmra.mrb[0].mxu0 %v2502
    %v2691 = vpop.f32.mrb[0].mxu0
    %v2692 = vadd.f32 0.0, %v2691
    %v2693 = vpop.f32.mrb[0].mxu0
    %2694 = vmatprep.mubr.f32.mxu0 0.0
    %2695 = vmatmul.mubr.f32.gmra.mrb[0].mxu0 %v2504
    %v2696 = vpop.f32.mrb[0].mxu0
    %v2697 = vadd.f32 0.0, %v2696
    %v2698 = vpop.f32.mrb[0].mxu0
    %2699 = vmatprep.mubr.f32.mxu0 0.0
    %2700 = vmatmul.mubr.f32.gmra.mrb[0].mxu0 %v2506
    %v2701 = vpop.f32.mrb[0].mxu0
    %v2702 = vadd.f32 0.0, %v2701
    %v2703 = vpop.f32.mrb[0].mxu0
    %2704 = vmatprep.mubr.f32.mxu0 0.0
    %2705 = vmatmul.mubr.f32.gmra.mrb[0].mxu0 %v2508
    %v2706 = vpop.f32.mrb[0].mxu0
    %v2707 = vadd.f32 0.0, %v2706
    %v2708 = vpop.f32.mrb[0].mxu0
    %2709 = vmatprep.mubr.f32.mxu0 0.0
    %2710 = vmatmul.mubr.f32.gmra.mrb[0].mxu0 %v2510
    %v2711 = vpop.f32.mrb[0].mxu0
    %v2712 = vadd.f32 0.0, %v2711
    %v2713 = vpop.f32.mrb[0].mxu0
    %2714 = vmatprep.mubr.f32.mxu0 0.0
    %2715 = vmatmul.mubr.f32.gmra.mrb[0].mxu0 %v2512
    %v2716 = vpop.f32.mrb[0].mxu0
    %v2717 = vadd.f32 0.0, %v2716
    %v2718 = vpop.f32.mrb[0].mxu0
    %2719 = vmatprep.mubr.f32.mxu0 0.0
    %2720 = vmatmul.mubr.f32.gmra.mrb[0].mxu0 %v2514
    %v2721 = vpop.f32.mrb[0].mxu0
    %v2722 = vadd.f32 0.0, %v2721
    %v2723 = vpop.f32.mrb[0].mxu0
    %2724 = vmatprep.mubr.f32.mxu0 0.0
    %2725 = vmatmul.mubr.f32.gmra.mrb[0].mxu0 %v2516
    %v2726 = vpop.f32.mrb[0].mxu0
    %v2727 = vadd.f32 0.0, %v2726
    %v2728 = vpop.f32.mrb[0].mxu0
    %2729 = vmatprep.mubr.f32.mxu0 0.0
    %2730 = vmatmul.mubr.f32.gmra.mrb[0].mxu0 %v2518
    %v2731 = vpop.f32.mrb[0].mxu0
    %v2732 = vadd.f32 0.0, %v2731
    %v2733 = vpop.f32.mrb[0].mxu0
    %2734 = vmatprep.mubr.f32.mxu0 0.0
    %2735 = vmatmul.mubr.f32.gmra.mrb[0].mxu0 %v2520
    %v2736 = vpop.f32.mrb[0].mxu0
    %v2737 = vadd.f32 0.0, %v2736
    %v2738 = vpop.f32.mrb[0].mxu0
    %2739 = vmatprep.mubr.f32.mxu0 0.0
    %2740 = vmatmul.mubr.f32.gmra.mrb[0].mxu0 %v2522
    %v2741 = vpop.f32.mrb[0].mxu0
    %v2742 = vadd.f32 0.0, %v2741
    %v2743 = vpop.f32.mrb[0].mxu0
    %2744 = vmatprep.mubr.f32.mxu0 0.0
    %2745 = vmatmul.mubr.f32.gmra.mrb[0].mxu0 %v2524
    %v2746 = vpop.f32.mrb[0].mxu0
    %v2747 = vadd.f32 0.0, %v2746
    %v2748 = vpop.f32.mrb[0].mxu0
    %2749 = vdwg.mxu0
    %v2750 = vrcp.pop %v2526
    %v2751 = vmul.f32 1.0, %v2750
    %v2752 = vrcp.pop %v2528
    %v2753 = vmul.f32 1.0, %v2752
    %v2754 = vrcp.pop %v2530
    %v2755 = vmul.f32 1.0, %v2754
    %v2756 = vrcp.pop %v2532
    %v2757 = vmul.f32 1.0, %v2756
    %v2758 = vrcp.pop %v2534
    %v2759 = vmul.f32 1.0, %v2758
    %v2760 = vrcp.pop %v2536
    %v2761 = vmul.f32 1.0, %v2760
    %v2762 = vrcp.pop %v2538
    %v2763 = vmul.f32 1.0, %v2762
    %v2764 = vrcp.pop %v2540
    %v2765 = vmul.f32 1.0, %v2764
    %v2766 = vrcp.pop %v2542
    %v2767 = vmul.f32 1.0, %v2766
    %v2768 = vrcp.pop %v2544
    %v2769 = vmul.f32 1.0, %v2768
    %v2770 = vrcp.pop %v2546
    %v2771 = vmul.f32 1.0, %v2770
    %v2772 = vrcp.pop %v2548
    %v2773 = vmul.f32 1.0, %v2772
    %v2774 = vrcp.pop %v2550
    %v2775 = vmul.f32 1.0, %v2774
    %v2776 = vrcp.pop %v2552
    %v2777 = vmul.f32 1.0, %v2776
    %v2778 = vrcp.pop %v2554
    %v2779 = vmul.f32 1.0, %v2778
    %v2780 = vrcp.pop %v2556
    %v2781 = vmul.f32 1.0, %v2780
    %v2782 = vmul.f32 %v2672, %v2751
    %v2783 = vmul.f32 %v2677, %v2753
    %v2784 = vmul.f32 %v2682, %v2755
    %v2785 = vmul.f32 %v2687, %v2757
    %v2786 = vmul.f32 %v2692, %v2759
    %v2787 = vmul.f32 %v2697, %v2761
    %v2788 = vmul.f32 %v2702, %v2763
    %v2789 = vmul.f32 %v2707, %v2765
    %v2790 = vmul.f32 %v2712, %v2767
    %v2791 = vmul.f32 %v2717, %v2769
    %v2792 = vmul.f32 %v2722, %v2771
    %v2793 = vmul.f32 %v2727, %v2773
    %v2794 = vmul.f32 %v2732, %v2775
    %v2795 = vmul.f32 %v2737, %v2777
    %v2796 = vmul.f32 %v2742, %v2779
    %v2797 = vmul.f32 %v2747, %v2781
    %2814 = vrot.lane.b32.xlu0 %v1400, 8
    %v2815 = vpop.permute.xlu0 %2814
    %2816 = vrot.lane.b32.xlu0 %v1401, 8
    %v2817 = vpop.permute.xlu0 %2816
    %2818 = vrot.lane.b32.xlu0 %v1402, 8
    %v2819 = vpop.permute.xlu0 %2818
    %2820 = vrot.lane.b32.xlu0 %v1403, 8
    %v2821 = vpop.permute.xlu0 %2820
    %2822 = vrot.lane.b32.xlu0 %v1404, 8
    %v2823 = vpop.permute.xlu0 %2822
    %2824 = vrot.lane.b32.xlu0 %v1405, 8
    %v2825 = vpop.permute.xlu0 %2824
    %2826 = vrot.lane.b32.xlu0 %v1406, 8
    %v2827 = vpop.permute.xlu0 %2826
    %2828 = vrot.lane.b32.xlu0 %v1407, 8
    %v2829 = vpop.permute.xlu0 %2828
    %2830 = vrot.lane.b32.xlu0 %v1408, 8
    %v2831 = vpop.permute.xlu0 %2830
    %2832 = vrot.lane.b32.xlu0 %v1409, 8
    %v2833 = vpop.permute.xlu0 %2832
    %2834 = vrot.lane.b32.xlu0 %v1410, 8
    %v2835 = vpop.permute.xlu0 %2834
    %2836 = vrot.lane.b32.xlu0 %v1411, 8
    %v2837 = vpop.permute.xlu0 %2836
    %2838 = vrot.lane.b32.xlu0 %v1412, 8
    %v2839 = vpop.permute.xlu0 %2838
    %2840 = vrot.lane.b32.xlu0 %v1413, 8
    %v2841 = vpop.permute.xlu0 %2840
    %2842 = vrot.lane.b32.xlu0 %v1414, 8
    %v2843 = vpop.permute.xlu0 %2842
    %2844 = vrot.lane.b32.xlu0 %v1415, 8
    %v2845 = vpop.permute.xlu0 %2844
    %2878 = vrot.lane.b32.xlu0 %v2091, 16
    %v2879 = vpop.permute.xlu0 %2878
    %2880 = vrot.lane.b32.xlu0 %v2092, 16
    %v2881 = vpop.permute.xlu0 %2880
    %2882 = vrot.lane.b32.xlu0 %v2093, 16
    %v2883 = vpop.permute.xlu0 %2882
    %2884 = vrot.lane.b32.xlu0 %v2094, 16
    %v2885 = vpop.permute.xlu0 %2884
    %2886 = vrot.lane.b32.xlu0 %v2095, 16
    %v2887 = vpop.permute.xlu0 %2886
    %2888 = vrot.lane.b32.xlu0 %v2096, 16
    %v2889 = vpop.permute.xlu0 %2888
    %2890 = vrot.lane.b32.xlu0 %v2097, 16
    %v2891 = vpop.permute.xlu0 %2890
    %2892 = vrot.lane.b32.xlu0 %v2098, 16
    %v2893 = vpop.permute.xlu0 %2892
    %2894 = vrot.lane.b32.xlu0 %v2099, 16
    %v2895 = vpop.permute.xlu0 %2894
    %2896 = vrot.lane.b32.xlu0 %v2100, 16
    %v2897 = vpop.permute.xlu0 %2896
    %2898 = vrot.lane.b32.xlu0 %v2101, 16
    %v2899 = vpop.permute.xlu0 %2898
    %2900 = vrot.lane.b32.xlu0 %v2102, 16
    %v2901 = vpop.permute.xlu0 %2900
    %2902 = vrot.lane.b32.xlu0 %v2103, 16
    %v2903 = vpop.permute.xlu0 %2902
    %2904 = vrot.lane.b32.xlu0 %v2104, 16
    %v2905 = vpop.permute.xlu0 %2904
    %2906 = vrot.lane.b32.xlu0 %v2105, 16
    %v2907 = vpop.permute.xlu0 %2906
    %2908 = vrot.lane.b32.xlu0 %v2106, 16
    %v2909 = vpop.permute.xlu0 %2908
    %2942 = vrot.lane.b32.xlu0 %v2782, 24
    %v2943 = vpop.permute.xlu0 %2942
    %2944 = vrot.lane.b32.xlu0 %v2783, 24
    %v2945 = vpop.permute.xlu0 %2944
    %2946 = vrot.lane.b32.xlu0 %v2784, 24
    %v2947 = vpop.permute.xlu0 %2946
    %2948 = vrot.lane.b32.xlu0 %v2785, 24
    %v2949 = vpop.permute.xlu0 %2948
    %2950 = vrot.lane.b32.xlu0 %v2786, 24
    %v2951 = vpop.permute.xlu0 %2950
    %2952 = vrot.lane.b32.xlu0 %v2787, 24
    %v2953 = vpop.permute.xlu0 %2952
    %2954 = vrot.lane.b32.xlu0 %v2788, 24
    %v2955 = vpop.permute.xlu0 %2954
    %2956 = vrot.lane.b32.xlu0 %v2789, 24
    %v2957 = vpop.permute.xlu0 %2956
    %2958 = vrot.lane.b32.xlu0 %v2790, 24
    %v2959 = vpop.permute.xlu0 %2958
    %2960 = vrot.lane.b32.xlu0 %v2791, 24
    %v2961 = vpop.permute.xlu0 %2960
    %2962 = vrot.lane.b32.xlu0 %v2792, 24
    %v2963 = vpop.permute.xlu0 %2962
    %2964 = vrot.lane.b32.xlu0 %v2793, 24
    %v2965 = vpop.permute.xlu0 %2964
    %2966 = vrot.lane.b32.xlu0 %v2794, 24
    %v2967 = vpop.permute.xlu0 %2966
    %2968 = vrot.lane.b32.xlu0 %v2795, 24
    %v2969 = vpop.permute.xlu0 %2968
    %2970 = vrot.lane.b32.xlu0 %v2796, 24
    %v2971 = vpop.permute.xlu0 %2970
    %2972 = vrot.lane.b32.xlu0 %v2797, 24
    %v2973 = vpop.permute.xlu0 %2972
    %v2990 = vsel %vm98, %v693, %v2815
    %v2991 = vsel %vm98, %v694, %v2817
    %v2992 = vsel %vm98, %v695, %v2819
    %v2993 = vsel %vm98, %v696, %v2821
    %v2994 = vsel %vm98, %v697, %v2823
    %v2995 = vsel %vm98, %v698, %v2825
    %v2996 = vsel %vm98, %v699, %v2827
    %v2997 = vsel %vm98, %v700, %v2829
    %v2998 = vsel %vm98, %v701, %v2831
    %v2999 = vsel %vm98, %v702, %v2833
    %v3000 = vsel %vm98, %v703, %v2835
    %v3001 = vsel %vm98, %v704, %v2837
    %v3002 = vsel %vm98, %v705, %v2839
    %v3003 = vsel %vm98, %v706, %v2841
    %v3004 = vsel %vm98, %v707, %v2843
    %v3005 = vsel %vm98, %v708, %v2845
    %vm3006 = vcmask 130048
    %v3007 = vsel %vm3006, %v2990, %v2879
    %v3008 = vsel %vm3006, %v2991, %v2881
    %v3009 = vsel %vm3006, %v2992, %v2883
    %v3010 = vsel %vm3006, %v2993, %v2885
    %v3011 = vsel %vm3006, %v2994, %v2887
    %v3012 = vsel %vm3006, %v2995, %v2889
    %v3013 = vsel %vm3006, %v2996, %v2891
    %v3014 = vsel %vm3006, %v2997, %v2893
    %v3015 = vsel %vm3006, %v2998, %v2895
    %v3016 = vsel %vm3006, %v2999, %v2897
    %v3017 = vsel %vm3006, %v3000, %v2899
    %v3018 = vsel %vm3006, %v3001, %v2901
    %v3019 = vsel %vm3006, %v3002, %v2903
    %v3020 = vsel %vm3006, %v3003, %v2905
    %v3021 = vsel %vm3006, %v3004, %v2907
    %v3022 = vsel %vm3006, %v3005, %v2909
    %vm3023 = vcmask 195584
    %v3024 = vsel %vm3023, %v3007, %v2943
    %v3025 = vsel %vm3023, %v3008, %v2945
    %v3026 = vsel %vm3023, %v3009, %v2947
    %v3027 = vsel %vm3023, %v3010, %v2949
    %v3028 = vsel %vm3023, %v3011, %v2951
    %v3029 = vsel %vm3023, %v3012, %v2953
    %v3030 = vsel %vm3023, %v3013, %v2955
    %v3031 = vsel %vm3023, %v3014, %v2957
    %v3032 = vsel %vm3023, %v3015, %v2959
    %v3033 = vsel %vm3023, %v3016, %v2961
    %v3034 = vsel %vm3023, %v3017, %v2963
    %v3035 = vsel %vm3023, %v3018, %v2965
    %v3036 = vsel %vm3023, %v3019, %v2967
    %v3037 = vsel %vm3023, %v3020, %v2969
    %v3038 = vsel %vm3023, %v3021, %v2971
    %v3039 = vsel %vm3023, %v3022, %v2973
    %vm3040 = vcmask 261120
    %3041 = vst.msk [vmem:[%s5] sm:$0xff] %vm3040, %v3024
    %3042 = vst.msk [vmem:[%s5 + $0x8] sm:$0xff] %vm3040, %v3025
    %3043 = vst.msk [vmem:[%s5 + $0x10] sm:$0xff] %vm3040, %v3026
    %3044 = vst.msk [vmem:[%s5 + $0x18] sm:$0xff] %vm3040, %v3027
    %3045 = vst.msk [vmem:[%s5 + $0x20] sm:$0xff] %vm3040, %v3028
    %3046 = vst.msk [vmem:[%s5 + $0x28] sm:$0xff] %vm3040, %v3029
    %3047 = vst.msk [vmem:[%s5 + $0x30] sm:$0xff] %vm3040, %v3030
    %3048 = vst.msk [vmem:[%s5 + $0x38] sm:$0xff] %vm3040, %v3031
    %3049 = vst.msk [vmem:[%s5 + $0x40] sm:$0xff] %vm3040, %v3032
    %3050 = vst.msk [vmem:[%s5 + $0x48] sm:$0xff] %vm3040, %v3033
    %3051 = vst.msk [vmem:[%s5 + $0x50] sm:$0xff] %vm3040, %v3034
    %3052 = vst.msk [vmem:[%s5 + $0x58] sm:$0xff] %vm3040, %v3035
    %3053 = vst.msk [vmem:[%s5 + $0x60] sm:$0xff] %vm3040, %v3036
    %3054 = vst.msk [vmem:[%s5 + $0x68] sm:$0xff] %vm3040, %v3037
    %3055 = vst.msk [vmem:[%s5 + $0x70] sm:$0xff] %vm3040, %v3038
    %3056 = vst.msk [vmem:[%s5 + $0x78] sm:$0xff] %vm3040, %v3039
    // Predicated region
    $region26: #{tpu_custom_call.1} parent=1 // pred_check
      _
    $region27: #{tpu_custom_call.1} parent=1 // pred_check_branch
      %3058 = sbr.rel (0) target = $region29
    $region28: #{tpu_custom_call.1} parent=1 // pred_region
      _
    $region29: #{tpu_custom_call.1} parent=1 // pred_fallthru
      _
    // Predicated region
    $region30: #{tpu_custom_call.1} parent=1 // pred_check
      _
    $region31: #{tpu_custom_call.1} parent=1 // pred_check_branch
      %3060 = sbr.rel (0) target = $region33
    $region32: #{tpu_custom_call.1} parent=1 // pred_region
      _
    $region33: #{tpu_custom_call.1} parent=1 // pred_fallthru
      _
    %3061 = vsyncpa [#allocation3], 1

</llo_original>
